<compile_context>
chip_gen: v5e
topology: v5e:2x2
jax: 0.10.0
libtpu: 0.0.40
codegen_flags: <defaults>
</compile_context>

<pallas_src>
import jax
import jax.numpy as jnp
from jax.experimental import pallas as pl
from jax.experimental.pallas import tpu as pltpu

# ---- model hyper-parameters (consistent with the module) -------------------
HIDDEN_DIM = 32
CLUSTER_NUM = 8                                  # C
CODE_BOOK_LEN = 16                               # L
MID_DIM = CLUSTER_NUM * CODE_BOOK_LEN // 2       # 64
OUT_DIM = CLUSTER_NUM * CODE_BOOK_LEN            # 128 (lane-dense)
BATCH = 8
EPS = 1e-10
TEMP = 0.1
INV_TEMP = 1.0 / TEMP
_HIGHEST = jax.lax.Precision.HIGHEST


def _encoder_kernel(x_ref, w1_ref, b1_ref, w2_ref, b2_ref, u_ref,
                    seg_ref, bcast_ref, out_ref):
    L, C = CODE_BOOK_LEN, CLUSTER_NUM
    tm = x_ref.shape[0]

    x = x_ref[...]                                               # (tm, H)

    # theta: Linear + tanh
    h = jnp.tanh(
        jnp.dot(x, w1_ref[...], preferred_element_type=jnp.float32,
                precision=_HIGHEST) + b1_ref[...])               # (tm, MID)

    # theta_p: Linear + softplus;  softplus(z) = max(z,0) + log1p(exp(-|z|))
    z = (jnp.dot(h, w2_ref[...], preferred_element_type=jnp.float32,
                 precision=_HIGHEST) + b2_ref[...])              # (tm, OUT)
    a = jnp.maximum(z, 0.0) + jnp.log1p(jnp.exp(-jnp.abs(z)))    # lane-dense

    # Gumbel noise from raw uniforms (lane-dense EUP work).
    u = u_ref[...]                                               # (tm, OUT)
    g = -jnp.log(-jnp.log(u + EPS) + EPS)

    # First softmax + log fused away: the final per-group softmax is
    # shift-invariant, so (a + g)/T gives the same output as (log p + g)/T.
    logits = (a + g) * INV_TEMP                                  # (tm, OUT)

    # Per-group max: minimal reshape for the reduce only, broadcast back via a
    # tiny one-hot (16,128) matmul (identical value per group -> exact softmax).
    m3 = jnp.max(logits.reshape(tm, L, C), axis=2)               # (tm, L)
    mb = jnp.dot(m3, bcast_ref[...], preferred_element_type=jnp.float32,
                 precision=_HIGHEST)                             # (tm, OUT)

    # exp / group-sum / divide, all lane-dense; the grouped sum (+ broadcast)
    # is one block-diagonal (128,128) ones matmul on the MXU.
    e = jnp.exp(logits - mb)                                     # (tm, OUT)
    s = jnp.dot(e, seg_ref[...], preferred_element_type=jnp.float32,
                precision=_HIGHEST)                              # (tm, OUT)
    out_ref[...] = (e / s).astype(out_ref.dtype)                 # lane-dense store


def _group_constants():
    """Block-diagonal ones (128,128) for the group sum and a one-hot (16,128)
    matrix for broadcasting a per-group scalar back to all 8 lanes."""
    gid = jnp.arange(OUT_DIM, dtype=jnp.int32) // CLUSTER_NUM          # lane -> group
    seg = (gid[:, None] == gid[None, :]).astype(jnp.float32)           # (128, 128)
    lid = jnp.arange(CODE_BOOK_LEN, dtype=jnp.int32)
    bcast = (lid[:, None] == gid[None, :]).astype(jnp.float32)         # (16, 128)
    return seg, bcast


def _default_tm(B):
    # Small batch: one grid step (minimize the ~0.35us/step overhead).
    if B < 256:
        return B
    # B >= 256: at least 2 "parallel" grid steps so v7x's 2 TensorCores both
    # get work; big tiles amortize per-step overhead for the HBM-bound regime.
    for tm in (4096, 2048, 1024, 512, 256, 128, 64, 32, 16, 8):
        if B % tm == 0 and B // tm >= 2:
            return tm
    return B


def encoder_forward(x, w1, b1, w2, b2, uniform_noise, *, tm=None):
    B, H = x.shape
    assert H == HIDDEN_DIM

    # lane-dense (B, 128) view of the raw uniform noise (row-major (L, C)).
    u2 = uniform_noise.reshape(B, OUT_DIM).astype(jnp.float32)
    seg, bcast = _group_constants()

    if tm is None:
        tm = _default_tm(B)
    assert B % tm == 0 and (tm % 8 == 0 or tm == B)
    grid = (B // tm,)

    y2 = pl.pallas_call(
        _encoder_kernel,
        out_shape=jax.ShapeDtypeStruct((B, OUT_DIM), jnp.float32),
        grid_spec=pltpu.PrefetchScalarGridSpec(
            num_scalar_prefetch=0,
            grid=grid,
            in_specs=[
                pl.BlockSpec((tm, H), lambda i: (i, 0)),              # x tile
                pl.BlockSpec((H, MID_DIM), lambda i: (0, 0)),         # W1 (resident)
                pl.BlockSpec((1, MID_DIM), lambda i: (0, 0)),         # b1
                pl.BlockSpec((MID_DIM, OUT_DIM), lambda i: (0, 0)),   # W2 (resident)
                pl.BlockSpec((1, OUT_DIM), lambda i: (0, 0)),         # b2
                pl.BlockSpec((tm, OUT_DIM), lambda i: (i, 0)),        # uniforms (lane-dense)
                pl.BlockSpec((OUT_DIM, OUT_DIM), lambda i: (0, 0)),   # block-diag ones
                pl.BlockSpec((CODE_BOOK_LEN, OUT_DIM), lambda i: (0, 0)),  # group one-hot
            ],
            out_specs=pl.BlockSpec((tm, OUT_DIM), lambda i: (i, 0)),
        ),
        compiler_params=pltpu.CompilerParams(
            dimension_semantics=("parallel",),
            vmem_limit_bytes=32 * 1024 * 1024),
    )(x, w1, b1, w2, b2, u2, seg, bcast)

    # restore the module's (B, code_book_len, cluster_num) view (free reshape).
    return y2.reshape(B, CODE_BOOK_LEN, CLUSTER_NUM)


def init_params(key):
    k1, k2, k3, k4 = jax.random.split(key, 4)
    w1 = jax.random.normal(k1, (HIDDEN_DIM, MID_DIM), jnp.float32) * (1.0 / jnp.sqrt(HIDDEN_DIM))
    b1 = jax.random.normal(k2, (1, MID_DIM), jnp.float32) * 0.01
    w2 = jax.random.normal(k3, (MID_DIM, OUT_DIM), jnp.float32) * (1.0 / jnp.sqrt(MID_DIM))
    b2 = jax.random.normal(k4, (1, OUT_DIM), jnp.float32) * 0.01
    return w1, b1, w2, b2


def encoder_reference(x, w1, b1, w2, b2, u):
    # pure-JAX reference mirroring the PyTorch forward (correctness check);
    # shares the raw uniforms u with the kernel path.
    h = jnp.tanh(jnp.dot(x, w1, precision=_HIGHEST) + b1)
    a = jax.nn.softplus(jnp.dot(h, w2, precision=_HIGHEST) + b2)
    a = a.reshape(-1, CODE_BOOK_LEN, CLUSTER_NUM)
    p = jax.nn.softmax(a, axis=2)
    g = -jnp.log(-jnp.log(u + EPS) + EPS)
    logits = (jnp.log(p + EPS) + g) / TEMP
    return jax.nn.softmax(logits, axis=2)


if __name__ == "__main__":
    key = jax.random.PRNGKey(0)
    k_x, k_params, k_u = jax.random.split(key, 3)

    x = jax.random.normal(k_x, (BATCH, HIDDEN_DIM), jnp.float32)
    w1, b1, w2, b2 = init_params(k_params)
    # raw uniforms; the gumbel transform -log(-log(u+eps)+eps) is done in-kernel
    u = jax.random.uniform(k_u, (BATCH, CODE_BOOK_LEN, CLUSTER_NUM), dtype=jnp.float32)

    y = encoder_forward(x, w1, b1, w2, b2, u)
    y = jax.block_until_ready(y)

    # sanity: shape, softmax rows sum to 1, and match the pure-JAX reference
    assert y.shape == (BATCH, CODE_BOOK_LEN, CLUSTER_NUM)
    row_sums = jnp.sum(y, axis=2)
    assert jnp.allclose(row_sums, jnp.ones_like(row_sums), atol=2e-3), \
        float(jnp.max(jnp.abs(row_sums - 1.0)))

    y_ref = encoder_reference(x, w1, b1, w2, b2, u)
    assert jnp.allclose(y, y_ref, atol=5e-3), float(jnp.max(jnp.abs(y - y_ref)))

    print("KERNEL_OK")
</pallas_src>

<mosaic_0001>
module attributes {stable_mosaic.version = 11 : i64} {
  func.func @_encoder_kernel(%arg0: i32, %arg1: memref<8x32xf32, #tpu.memory_space<vmem>>, %arg2: memref<32x64xf32, #tpu.memory_space<vmem>>, %arg3: memref<1x64xf32, #tpu.memory_space<vmem>>, %arg4: memref<64x128xf32, #tpu.memory_space<vmem>>, %arg5: memref<1x128xf32, #tpu.memory_space<vmem>>, %arg6: memref<8x128xf32, #tpu.memory_space<vmem>>, %arg7: memref<128x128xf32, #tpu.memory_space<vmem>>, %arg8: memref<16x128xf32, #tpu.memory_space<vmem>>, %arg9: memref<8x128xf32, #tpu.memory_space<vmem>>) attributes {dimension_semantics = [#tpu.dimension_semantics<parallel>], iteration_bounds = array<i64: 1>, scalar_prefetch = 0 : i64, scratch_operands = 0 : i64, tpu.core_type = #tpu.core_type<tc>, window_params = [{transform_indices = @transform_0, window_bounds = array<i64: 8, 32>}, {pipeline_mode = #tpu.pipeline_mode<synchronous>, transform_indices = @transform_1, window_bounds = array<i64: 32, 64>}, {pipeline_mode = #tpu.pipeline_mode<synchronous>, transform_indices = @transform_2, window_bounds = array<i64: 1, 64>}, {pipeline_mode = #tpu.pipeline_mode<synchronous>, transform_indices = @transform_3, window_bounds = array<i64: 64, 128>}, {pipeline_mode = #tpu.pipeline_mode<synchronous>, transform_indices = @transform_4, window_bounds = array<i64: 1, 128>}, {transform_indices = @transform_5, window_bounds = array<i64: 8, 128>}, {pipeline_mode = #tpu.pipeline_mode<synchronous>, transform_indices = @transform_6, window_bounds = array<i64: 128, 128>}, {pipeline_mode = #tpu.pipeline_mode<synchronous>, transform_indices = @transform_7, window_bounds = array<i64: 16, 128>}, {transform_indices = @transform_8, window_bounds = array<i64: 8, 128>}]} {
    %c0 = arith.constant 0 : index
    %c0_0 = arith.constant 0 : index
    %0 = vector.load %arg1[%c0, %c0_0] : memref<8x32xf32, #tpu.memory_space<vmem>>, vector<8x32xf32>
    %c0_1 = arith.constant 0 : index
    %c0_2 = arith.constant 0 : index
    %1 = vector.load %arg2[%c0_1, %c0_2] : memref<32x64xf32, #tpu.memory_space<vmem>>, vector<32x64xf32>
    %cst = arith.constant dense<0.000000e+00> : vector<8x64xf32>
    %2 = tpu.matmul %0, %1, %cst {dimension_numbers = #tpu.dot_dimension_numbers<[1], [0], [0], [1], [0, 0, 1, 1], [], []>, precision = #tpu.contract_precision<fp32>} : vector<8x32xf32>, vector<32x64xf32>, vector<8x64xf32> -> vector<8x64xf32>
    %c0_3 = arith.constant 0 : index
    %c0_4 = arith.constant 0 : index
    %3 = vector.load %arg3[%c0_3, %c0_4] : memref<1x64xf32, #tpu.memory_space<vmem>>, vector<1x64xf32>
    %4 = vector.broadcast %3 : vector<1x64xf32> to vector<8x64xf32>
    %5 = arith.addf %2, %4 : vector<8x64xf32>
    %6 = math.tanh %5 : vector<8x64xf32>
    %c0_5 = arith.constant 0 : index
    %c0_6 = arith.constant 0 : index
    %7 = vector.load %arg4[%c0_5, %c0_6] : memref<64x128xf32, #tpu.memory_space<vmem>>, vector<64x128xf32>
    %cst_7 = arith.constant dense<0.000000e+00> : vector<8x128xf32>
    %8 = tpu.matmul %6, %7, %cst_7 {dimension_numbers = #tpu.dot_dimension_numbers<[1], [0], [0], [1], [0, 0, 1, 1], [], []>, precision = #tpu.contract_precision<fp32>} : vector<8x64xf32>, vector<64x128xf32>, vector<8x128xf32> -> vector<8x128xf32>
    %c0_8 = arith.constant 0 : index
    %c0_9 = arith.constant 0 : index
    %9 = vector.load %arg5[%c0_8, %c0_9] : memref<1x128xf32, #tpu.memory_space<vmem>>, vector<1x128xf32>
    %10 = vector.broadcast %9 : vector<1x128xf32> to vector<8x128xf32>
    %11 = arith.addf %8, %10 : vector<8x128xf32>
    %cst_10 = arith.constant 0.000000e+00 : f32
    %12 = vector.broadcast %cst_10 : f32 to vector<8x128xf32>
    %13 = arith.maximumf %11, %12 : vector<8x128xf32>
    %14 = math.absf %11 : vector<8x128xf32>
    %cst_11 = arith.constant 0.000000e+00 : f32
    %15 = vector.broadcast %cst_11 : f32 to vector<8x128xf32>
    %16 = arith.subf %15, %14 : vector<8x128xf32>
    %17 = math.exp %16 : vector<8x128xf32>
    %18 = math.log1p %17 : vector<8x128xf32>
    %19 = arith.addf %13, %18 : vector<8x128xf32>
    %c0_12 = arith.constant 0 : index
    %c0_13 = arith.constant 0 : index
    %20 = vector.load %arg6[%c0_12, %c0_13] : memref<8x128xf32, #tpu.memory_space<vmem>>, vector<8x128xf32>
    %cst_14 = arith.constant 1.000000e-10 : f32
    %21 = vector.broadcast %cst_14 : f32 to vector<8x128xf32>
    %22 = arith.addf %20, %21 : vector<8x128xf32>
    %23 = math.log %22 : vector<8x128xf32>
    %cst_15 = arith.constant 0.000000e+00 : f32
    %24 = vector.broadcast %cst_15 : f32 to vector<8x128xf32>
    %25 = arith.subf %24, %23 : vector<8x128xf32>
    %cst_16 = arith.constant 1.000000e-10 : f32
    %26 = vector.broadcast %cst_16 : f32 to vector<8x128xf32>
    %27 = arith.addf %25, %26 : vector<8x128xf32>
    %28 = math.log %27 : vector<8x128xf32>
    %cst_17 = arith.constant 0.000000e+00 : f32
    %29 = vector.broadcast %cst_17 : f32 to vector<8x128xf32>
    %30 = arith.subf %29, %28 : vector<8x128xf32>
    %31 = arith.addf %19, %30 : vector<8x128xf32>
    %cst_18 = arith.constant 1.000000e+01 : f32
    %32 = vector.broadcast %cst_18 : f32 to vector<8x128xf32>
    %33 = arith.mulf %31, %32 : vector<8x128xf32>
    %34 = vector.shape_cast %33 : vector<8x128xf32> to vector<8x16x8xf32>
    %cst_19 = arith.constant dense<0xFF800000> : vector<8x16xf32>
    %35 = vector.multi_reduction <maximumf>, %34, %cst_19 [2] : vector<8x16x8xf32> to vector<8x16xf32>
    %c0_20 = arith.constant 0 : index
    %c0_21 = arith.constant 0 : index
    %36 = vector.load %arg8[%c0_20, %c0_21] : memref<16x128xf32, #tpu.memory_space<vmem>>, vector<16x128xf32>
    %cst_22 = arith.constant dense<0.000000e+00> : vector<8x128xf32>
    %37 = tpu.matmul %35, %36, %cst_22 {dimension_numbers = #tpu.dot_dimension_numbers<[1], [0], [0], [1], [0, 0, 1, 1], [], []>, precision = #tpu.contract_precision<fp32>} : vector<8x16xf32>, vector<16x128xf32>, vector<8x128xf32> -> vector<8x128xf32>
    %38 = arith.subf %33, %37 : vector<8x128xf32>
    %39 = math.exp %38 : vector<8x128xf32>
    %c0_23 = arith.constant 0 : index
    %c0_24 = arith.constant 0 : index
    %40 = vector.load %arg7[%c0_23, %c0_24] : memref<128x128xf32, #tpu.memory_space<vmem>>, vector<128x128xf32>
    %cst_25 = arith.constant dense<0.000000e+00> : vector<8x128xf32>
    %41 = tpu.matmul %39, %40, %cst_25 {dimension_numbers = #tpu.dot_dimension_numbers<[1], [0], [0], [1], [0, 0, 1, 1], [], []>, precision = #tpu.contract_precision<fp32>} : vector<8x128xf32>, vector<128x128xf32>, vector<8x128xf32> -> vector<8x128xf32>
    %42 = arith.divf %39, %41 : vector<8x128xf32>
    %c0_26 = arith.constant 0 : index
    %c0_27 = arith.constant 0 : index
    %43 = vector.load %arg9[%c0_26, %c0_27] : memref<8x128xf32, #tpu.memory_space<vmem>>, vector<8x128xf32>
    tpu.vector_store %arg9[%c0_26, %c0_27], %42 {strides = array<i32>} : memref<8x128xf32, #tpu.memory_space<vmem>>, vector<8x128xf32>,
    return
  }
  func.func @transform_0(%arg0: i32) -> (i32, i32) {
    %c0_i32 = arith.constant 0 : i32
    %c0_i32_0 = arith.constant 0 : i32
    return %arg0, %c0_i32 : i32, i32
  }
  func.func @transform_1(%arg0: i32) -> (i32, i32) {
    %c0_i32 = arith.constant 0 : i32
    %c0_i32_0 = arith.constant 0 : i32
    %c0_i32_1 = arith.constant 0 : i32
    return %c0_i32, %c0_i32_0 : i32, i32
  }
  func.func @transform_2(%arg0: i32) -> (i32, i32) {
    %c0_i32 = arith.constant 0 : i32
    %c0_i32_0 = arith.constant 0 : i32
    %c0_i32_1 = arith.constant 0 : i32
    return %c0_i32, %c0_i32_0 : i32, i32
  }
  func.func @transform_3(%arg0: i32) -> (i32, i32) {
    %c0_i32 = arith.constant 0 : i32
    %c0_i32_0 = arith.constant 0 : i32
    %c0_i32_1 = arith.constant 0 : i32
    return %c0_i32, %c0_i32_0 : i32, i32
  }
  func.func @transform_4(%arg0: i32) -> (i32, i32) {
    %c0_i32 = arith.constant 0 : i32
    %c0_i32_0 = arith.constant 0 : i32
    %c0_i32_1 = arith.constant 0 : i32
    return %c0_i32, %c0_i32_0 : i32, i32
  }
  func.func @transform_5(%arg0: i32) -> (i32, i32) {
    %c0_i32 = arith.constant 0 : i32
    %c0_i32_0 = arith.constant 0 : i32
    return %arg0, %c0_i32 : i32, i32
  }
  func.func @transform_6(%arg0: i32) -> (i32, i32) {
    %c0_i32 = arith.constant 0 : i32
    %c0_i32_0 = arith.constant 0 : i32
    %c0_i32_1 = arith.constant 0 : i32
    return %c0_i32, %c0_i32_0 : i32, i32
  }
  func.func @transform_7(%arg0: i32) -> (i32, i32) {
    %c0_i32 = arith.constant 0 : i32
    %c0_i32_0 = arith.constant 0 : i32
    %c0_i32_1 = arith.constant 0 : i32
    return %c0_i32, %c0_i32_0 : i32, i32
  }
  func.func @transform_8(%arg0: i32) -> (i32, i32) {
    %c0_i32 = arith.constant 0 : i32
    %c0_i32_0 = arith.constant 0 : i32
    return %arg0, %c0_i32 : i32, i32
  }
}

</mosaic_0001>

<llo_original>
// kernel: tpu_custom_call.1
$region0: #{tpu_custom_call.1}
  #allocation0 [shape = 'u32[]', space=smem, size = 0x4, offset = 0x4, fixed_abs, tag = 'smem constant byte address 0x4 - core index']
  #allocation1 [shape = 'u32[72,128]{1,0:T(1,128)}', space=vmem, size = 0x9000, scoped, tag = 'internal scratch']
  %s0 = inlined_call_operand.hbm [shape: f32[8,32], index: 0, kind: input, shape index: {}]
  %s1 = inlined_call_operand.hbm [shape: f32[32,64], index: 1, kind: input, shape index: {}]
  %s2 = inlined_call_operand.vmem [shape: f32[1,64], index: 2, kind: input, shape index: {}]
  %s3 = inlined_call_operand.hbm [shape: f32[64,128], index: 3, kind: input, shape index: {}]
  %s4 = inlined_call_operand.vmem [shape: f32[1,128], index: 4, kind: input, shape index: {}]
  %s5 = inlined_call_operand.hbm [shape: f32[8,128], index: 5, kind: input, shape index: {}]
  %s6 = inlined_call_operand.hbm [shape: f32[128,128], index: 6, kind: input, shape index: {}]
  %s7 = inlined_call_operand.hbm [shape: f32[16,128], index: 7, kind: input, shape index: {}]
  %s8 = inlined_call_operand.hbm [shape: f32[8,128], index: 8, kind: output, shape index: {}]
  %s9 = sld [smem:[#allocation0]]
  $region66: #{tpu_custom_call.1} parent=0
    _
  %s11 = ssub.s32 1, %s9
  %s12 = scalar_select 0, %s11, %s9
  $region1: #{tpu_custom_call.1} parent=0
    #allocation2 [shape = 'u8[4096]{0}', space=vmem, size = 0x1000, scoped, tag = 'input window, operand 0, single buffered']
    #allocation3 [shape = 's32[1]{0}', space=sflag, size = 0x4, scoped, tag = 'scoped memory for tpu_custom_call.1']
    #allocation4 [shape = 's32[1]{0}', space=sflag, size = 0x4, scoped, tag = 'scoped memory for tpu_custom_call.1']
    #allocation5 [shape = 'u8[16384]{0}', space=vmem, size = 0x4000, scoped, tag = 'input window, operand 1, single buffered']
    #allocation6 [shape = 's32[1]{0}', space=sflag, size = 0x4, scoped, tag = 'scoped memory for tpu_custom_call.1']
    #allocation7 [shape = 'u8[32768]{0}', space=vmem, size = 0x8000, scoped, tag = 'input window, operand 3, single buffered']
    #allocation8 [shape = 'u8[4096]{0}', space=vmem, size = 0x1000, scoped, tag = 'input window, operand 5, single buffered']
    #allocation9 [shape = 's32[1]{0}', space=sflag, size = 0x4, scoped, tag = 'scoped memory for tpu_custom_call.1']
    #allocation10 [shape = 'u8[65536]{0}', space=vmem, size = 0x10000, scoped, tag = 'input window, operand 6, single buffered']
    #allocation11 [shape = 'u8[8192]{0}', space=vmem, size = 0x2000, scoped, tag = 'input window, operand 7, single buffered']
    #allocation12 [shape = 's32[1]{0}', space=sflag, size = 0x4, scoped, tag = 'scoped memory for tpu_custom_call.1']
    #allocation13 [shape = 'u8[4096]{0}', space=vmem, size = 0x1000, scoped, tag = 'output window, operand 0, single buffered']
    %13 = vsyncpa [#allocation3], 0
    %14 = vsyncpa [#allocation6], 0
    %15 = vsyncpa [#allocation9], 0
    %16 = vsyncpa [#allocation12], 0
    %17 = vsyncpa [#allocation4], 0
    // Predicated region
    $region2: #{tpu_custom_call.1} parent=1 // pred_check
      _
    $region3: #{tpu_custom_call.1} parent=1 // pred_check_branch
      %19 = sbr.rel (0) target = $region5
    $region4: #{tpu_custom_call.1} parent=1 // pred_region
      %21 = vsyncadd [#allocation3], 0
      %s23 = sshll.u32 %s0, 4
      %s24 = int_to_ptr.hbm [resolvable:$true] %s23
      %s25 = sshll.u32 [#allocation2], 4
      %s26 = int_to_ptr.vmem [resolvable:$true] %s25
      %28 = dma.hbm_to_vmem [thread:$0]  %s24, 128, %s26, [#allocation3]
    $region5: #{tpu_custom_call.1} parent=1 // pred_fallthru
      _
    // Predicated region
    $region6: #{tpu_custom_call.1} parent=1 // pred_check
      _
    $region7: #{tpu_custom_call.1} parent=1 // pred_check_branch
      %30 = sbr.rel (0) target = $region9
    $region8: #{tpu_custom_call.1} parent=1 // pred_region
      %32 = vsyncadd [#allocation6], 0
      %s33 = sshll.u32 %s1, 4
      %s34 = int_to_ptr.hbm [resolvable:$true] %s33
      %s35 = sshll.u32 [#allocation5], 4
      %s36 = int_to_ptr.vmem [resolvable:$true] %s35
      %41 = dma.hbm_to_vmem [thread:$0]  %s34, 512, %s36, [#allocation6], 128, 128, 8
    $region9: #{tpu_custom_call.1} parent=1 // pred_fallthru
      _
    // Predicated region
    $region10: #{tpu_custom_call.1} parent=1 // pred_check
      _
    $region11: #{tpu_custom_call.1} parent=1 // pred_check_branch
      %43 = sbr.rel (0) target = $region13
    $region12: #{tpu_custom_call.1} parent=1 // pred_region
      _
    $region13: #{tpu_custom_call.1} parent=1 // pred_fallthru
      _
    // Predicated region
    $region14: #{tpu_custom_call.1} parent=1 // pred_check
      _
    $region15: #{tpu_custom_call.1} parent=1 // pred_check_branch
      %45 = sbr.rel (0) target = $region17
    $region16: #{tpu_custom_call.1} parent=1 // pred_region
      %47 = vsyncadd [#allocation6], 0
      %s48 = sshll.u32 %s3, 4
      %s49 = int_to_ptr.hbm [resolvable:$true] %s48
      %s50 = sshll.u32 [#allocation7], 4
      %s51 = int_to_ptr.vmem [resolvable:$true] %s50
      %56 = dma.hbm_to_vmem [thread:$0]  %s49, 1024, %s51, [#allocation6], 128, 128, 8
    $region17: #{tpu_custom_call.1} parent=1 // pred_fallthru
      _
    // Predicated region
    $region18: #{tpu_custom_call.1} parent=1 // pred_check
      _
    $region19: #{tpu_custom_call.1} parent=1 // pred_check_branch
      %58 = sbr.rel (0) target = $region21
    $region20: #{tpu_custom_call.1} parent=1 // pred_region
      _
    $region21: #{tpu_custom_call.1} parent=1 // pred_fallthru
      _
    // Predicated region
    $region22: #{tpu_custom_call.1} parent=1 // pred_check
      _
    $region23: #{tpu_custom_call.1} parent=1 // pred_check_branch
      %60 = sbr.rel (0) target = $region25
    $region24: #{tpu_custom_call.1} parent=1 // pred_region
      %62 = vsyncadd [#allocation9], 0
      %s64 = sshll.u32 %s5, 4
      %s65 = int_to_ptr.hbm [resolvable:$true] %s64
      %s66 = sshll.u32 [#allocation8], 4
      %s67 = int_to_ptr.vmem [resolvable:$true] %s66
      %69 = dma.hbm_to_vmem [thread:$0]  %s65, 128, %s67, [#allocation9]
    $region25: #{tpu_custom_call.1} parent=1 // pred_fallthru
      _
    // Predicated region
    $region26: #{tpu_custom_call.1} parent=1 // pred_check
      _
    $region27: #{tpu_custom_call.1} parent=1 // pred_check_branch
      %71 = sbr.rel (0) target = $region29
    $region28: #{tpu_custom_call.1} parent=1 // pred_region
      %73 = vsyncadd [#allocation9], 0
      %s74 = sshll.u32 %s6, 4
      %s75 = int_to_ptr.hbm [resolvable:$true] %s74
      %s76 = sshll.u32 [#allocation10], 4
      %s77 = int_to_ptr.vmem [resolvable:$true] %s76
      %82 = dma.hbm_to_vmem [thread:$0]  %s75, 2048, %s77, [#allocation9], 128, 128, 8
    $region29: #{tpu_custom_call.1} parent=1 // pred_fallthru
      _
    // Predicated region
    $region30: #{tpu_custom_call.1} parent=1 // pred_check
      _
    $region31: #{tpu_custom_call.1} parent=1 // pred_check_branch
      %84 = sbr.rel (0) target = $region33
    $region32: #{tpu_custom_call.1} parent=1 // pred_region
      %86 = vsyncadd [#allocation12], 0
      %s87 = sshll.u32 %s7, 4
      %s88 = int_to_ptr.hbm [resolvable:$true] %s87
      %s89 = sshll.u32 [#allocation11], 4
      %s90 = int_to_ptr.vmem [resolvable:$true] %s89
      %95 = dma.hbm_to_vmem [thread:$0]  %s88, 256, %s90, [#allocation12], 128, 128, 8
    $region33: #{tpu_custom_call.1} parent=1 // pred_fallthru
      _
    // Predicated region
    $region34: #{tpu_custom_call.1} parent=1 // pred_check
      _
    $region35: #{tpu_custom_call.1} parent=1 // pred_check_branch
      %97 = sbr.rel (0) target = $region37
    $region36: #{tpu_custom_call.1} parent=1 // pred_region
      %99 = dma.done [#allocation3], 128
    $region37: #{tpu_custom_call.1} parent=1 // pred_fallthru
      _
    // Predicated region
    $region38: #{tpu_custom_call.1} parent=1 // pred_check
      _
    $region39: #{tpu_custom_call.1} parent=1 // pred_check_branch
      %101 = sbr.rel (0) target = $region41
    $region40: #{tpu_custom_call.1} parent=1 // pred_region
      %103 = dma.done [#allocation6], 512
    $region41: #{tpu_custom_call.1} parent=1 // pred_fallthru
      _
    // Predicated region
    $region42: #{tpu_custom_call.1} parent=1 // pred_check
      _
    $region43: #{tpu_custom_call.1} parent=1 // pred_check_branch
      %105 = sbr.rel (0) target = $region45
    $region44: #{tpu_custom_call.1} parent=1 // pred_region
      %107 = dma.done [#allocation6], 1024
    $region45: #{tpu_custom_call.1} parent=1 // pred_fallthru
      _
    // Predicated region
    $region46: #{tpu_custom_call.1} parent=1 // pred_check
      _
    $region47: #{tpu_custom_call.1} parent=1 // pred_check_branch
      %109 = sbr.rel (0) target = $region49
    $region48: #{tpu_custom_call.1} parent=1 // pred_region
      %111 = dma.done [#allocation9], 128
    $region49: #{tpu_custom_call.1} parent=1 // pred_fallthru
      _
    // Predicated region
    $region50: #{tpu_custom_call.1} parent=1 // pred_check
      _
    $region51: #{tpu_custom_call.1} parent=1 // pred_check_branch
      %113 = sbr.rel (0) target = $region53
    $region52: #{tpu_custom_call.1} parent=1 // pred_region
      %115 = dma.done [#allocation9], 2048
    $region53: #{tpu_custom_call.1} parent=1 // pred_fallthru
      _
    // Predicated region
    $region54: #{tpu_custom_call.1} parent=1 // pred_check
      _
    $region55: #{tpu_custom_call.1} parent=1 // pred_check_branch
      %117 = sbr.rel (0) target = $region57
    $region56: #{tpu_custom_call.1} parent=1 // pred_region
      %119 = dma.done [#allocation12], 256
    $region57: #{tpu_custom_call.1} parent=1 // pred_fallthru
      _
    %v120 = vld [vmem:[#allocation2] sm:$0xff]
    %v121 = vld [vmem:[#allocation5] sm:$0xff]
    %v122 = vld [vmem:[#allocation5 + $0x8] sm:$0xff]
    %v123 = vld [vmem:[#allocation5 + $0x10] sm:$0xff]
    %v124 = vld [vmem:[#allocation5 + $0x18] sm:$0xff]
    %v125 = vld [vmem:[%s2] sm:$0x1]
    %v127 = vperm.slane %v125, 0
    %vm129 = vcmask 261120
    %v131 = vsel %vm129, %v120, 0
    %133 = vmatpush.msra.mxu0 0.0
    %134 = vmatpush.msra.mxu0 0.0
    %135 = vmatpush.msra.mxu0 0.0
    %136 = vmatpush.msra.mxu0 0.0
    %137 = vmatpush.msra.mxu0 0.0
    %138 = vmatpush.msra.mxu0 0.0
    %139 = vmatpush.msra.mxu0 0.0
    %140 = vmatpush.msra.mxu0 0.0
    %141 = vmatpush.msra.mxu0 0.0
    %142 = vmatpush.msra.mxu0 0.0
    %143 = vmatpush.msra.mxu0 0.0
    %144 = vmatpush.msra.mxu0 0.0
    %v145 = vand.u32 %v124, 4294901760
    %146 = vmatpush.msra.mxu0 %v145
    %v147 = vand.u32 %v123, 4294901760
    %148 = vmatpush.msra.mxu0 %v147
    %v149 = vand.u32 %v122, 4294901760
    %150 = vmatpush.msra.mxu0 %v149
    %v151 = vand.u32 %v121, 4294901760
    %152 = vmatpush.msra.mxu0 %v151
    %v153 = vand.u32 %v131, 4294901760
    %v154 = vsub.f32 %v131, %v153
    %v155 = vand.u32 %v154, 4294901760
    %v156 = vsub.f32 %v154, %v155
    %v157 = vand.u32 %v156, 4294901760
    %158 = vmatmul.f32.gmra.mxu0 %v157
    %v159 = vpop.f32.mrf.mxu0
    %v160 = vadd.f32 %v127, %v159
    %161 = vdwg.mxu0
    %162 = vmatpush.msra.mxu0 0.0
    %163 = vmatpush.msra.mxu0 0.0
    %164 = vmatpush.msra.mxu0 0.0
    %165 = vmatpush.msra.mxu0 0.0
    %166 = vmatpush.msra.mxu0 0.0
    %167 = vmatpush.msra.mxu0 0.0
    %168 = vmatpush.msra.mxu0 0.0
    %169 = vmatpush.msra.mxu0 0.0
    %170 = vmatpush.msra.mxu0 0.0
    %171 = vmatpush.msra.mxu0 0.0
    %172 = vmatpush.msra.mxu0 0.0
    %173 = vmatpush.msra.mxu0 0.0
    %v174 = vand.u32 %v124, 4294901760
    %v175 = vsub.f32 %v124, %v174
    %v176 = vand.u32 %v175, 4294901760
    %v177 = vsub.f32 %v175, %v176
    %v178 = vand.u32 %v177, 4294901760
    %179 = vmatpush.msra.mxu0 %v178
    %v180 = vand.u32 %v123, 4294901760
    %v181 = vsub.f32 %v123, %v180
    %v182 = vand.u32 %v181, 4294901760
    %v183 = vsub.f32 %v181, %v182
    %v184 = vand.u32 %v183, 4294901760
    %185 = vmatpush.msra.mxu0 %v184
    %v186 = vand.u32 %v122, 4294901760
    %v187 = vsub.f32 %v122, %v186
    %v188 = vand.u32 %v187, 4294901760
    %v189 = vsub.f32 %v187, %v188
    %v190 = vand.u32 %v189, 4294901760
    %191 = vmatpush.msra.mxu0 %v190
    %v192 = vand.u32 %v121, 4294901760
    %v193 = vsub.f32 %v121, %v192
    %v194 = vand.u32 %v193, 4294901760
    %v195 = vsub.f32 %v193, %v194
    %v196 = vand.u32 %v195, 4294901760
    %197 = vmatpush.msra.mxu0 %v196
    %v198 = vand.u32 %v131, 4294901760
    %199 = vmatmul.f32.gmra.mxu0 %v198
    %v200 = vpop.f32.mrf.mxu0
    %v201 = vadd.f32 %v160, %v200
    %202 = vdwg.mxu0
    %203 = vmatpush.msra.mxu0 0.0
    %204 = vmatpush.msra.mxu0 0.0
    %205 = vmatpush.msra.mxu0 0.0
    %206 = vmatpush.msra.mxu0 0.0
    %207 = vmatpush.msra.mxu0 0.0
    %208 = vmatpush.msra.mxu0 0.0
    %209 = vmatpush.msra.mxu0 0.0
    %210 = vmatpush.msra.mxu0 0.0
    %211 = vmatpush.msra.mxu0 0.0
    %212 = vmatpush.msra.mxu0 0.0
    %213 = vmatpush.msra.mxu0 0.0
    %214 = vmatpush.msra.mxu0 0.0
    %v215 = vand.u32 %v124, 4294901760
    %v216 = vsub.f32 %v124, %v215
    %217 = vmatpush.msra.mxu0 %v216
    %v218 = vand.u32 %v123, 4294901760
    %v219 = vsub.f32 %v123, %v218
    %220 = vmatpush.msra.mxu0 %v219
    %v221 = vand.u32 %v122, 4294901760
    %v222 = vsub.f32 %v122, %v221
    %223 = vmatpush.msra.mxu0 %v222
    %v224 = vand.u32 %v121, 4294901760
    %v225 = vsub.f32 %v121, %v224
    %226 = vmatpush.msra.mxu0 %v225
    %v227 = vand.u32 %v131, 4294901760
    %v228 = vsub.f32 %v131, %v227
    %229 = vmatmul.f32.gmra.mxu0 %v228
    %v230 = vpop.f32.mrf.mxu0
    %v231 = vadd.f32 %v201, %v230
    %232 = vdwg.mxu0
    %233 = vmatpush.msra.mxu0 0.0
    %234 = vmatpush.msra.mxu0 0.0
    %235 = vmatpush.msra.mxu0 0.0
    %236 = vmatpush.msra.mxu0 0.0
    %237 = vmatpush.msra.mxu0 0.0
    %238 = vmatpush.msra.mxu0 0.0
    %239 = vmatpush.msra.mxu0 0.0
    %240 = vmatpush.msra.mxu0 0.0
    %241 = vmatpush.msra.mxu0 0.0
    %242 = vmatpush.msra.mxu0 0.0
    %243 = vmatpush.msra.mxu0 0.0
    %244 = vmatpush.msra.mxu0 0.0
    %v245 = vand.u32 %v124, 4294901760
    %246 = vmatpush.msra.mxu0 %v245
    %v247 = vand.u32 %v123, 4294901760
    %248 = vmatpush.msra.mxu0 %v247
    %v249 = vand.u32 %v122, 4294901760
    %250 = vmatpush.msra.mxu0 %v249
    %v251 = vand.u32 %v121, 4294901760
    %252 = vmatpush.msra.mxu0 %v251
    %v253 = vand.u32 %v131, 4294901760
    %v254 = vsub.f32 %v131, %v253
    %v255 = vand.u32 %v254, 4294901760
    %256 = vmatmul.f32.gmra.mxu0 %v255
    %v257 = vpop.f32.mrf.mxu0
    %v258 = vadd.f32 %v231, %v257
    %259 = vdwg.mxu0
    %260 = vmatpush.msra.mxu0 0.0
    %261 = vmatpush.msra.mxu0 0.0
    %262 = vmatpush.msra.mxu0 0.0
    %263 = vmatpush.msra.mxu0 0.0
    %264 = vmatpush.msra.mxu0 0.0
    %265 = vmatpush.msra.mxu0 0.0
    %266 = vmatpush.msra.mxu0 0.0
    %267 = vmatpush.msra.mxu0 0.0
    %268 = vmatpush.msra.mxu0 0.0
    %269 = vmatpush.msra.mxu0 0.0
    %270 = vmatpush.msra.mxu0 0.0
    %271 = vmatpush.msra.mxu0 0.0
    %v272 = vand.u32 %v124, 4294901760
    %v273 = vsub.f32 %v124, %v272
    %v274 = vand.u32 %v273, 4294901760
    %275 = vmatpush.msra.mxu0 %v274
    %v276 = vand.u32 %v123, 4294901760
    %v277 = vsub.f32 %v123, %v276
    %v278 = vand.u32 %v277, 4294901760
    %279 = vmatpush.msra.mxu0 %v278
    %v280 = vand.u32 %v122, 4294901760
    %v281 = vsub.f32 %v122, %v280
    %v282 = vand.u32 %v281, 4294901760
    %283 = vmatpush.msra.mxu0 %v282
    %v284 = vand.u32 %v121, 4294901760
    %v285 = vsub.f32 %v121, %v284
    %v286 = vand.u32 %v285, 4294901760
    %287 = vmatpush.msra.mxu0 %v286
    %v288 = vand.u32 %v131, 4294901760
    %289 = vmatmul.f32.gmra.mxu0 %v288
    %v290 = vpop.f32.mrf.mxu0
    %v291 = vadd.f32 %v258, %v290
    %292 = vdwg.mxu0
    %293 = vmatpush.msra.mxu0 0.0
    %294 = vmatpush.msra.mxu0 0.0
    %295 = vmatpush.msra.mxu0 0.0
    %296 = vmatpush.msra.mxu0 0.0
    %297 = vmatpush.msra.mxu0 0.0
    %298 = vmatpush.msra.mxu0 0.0
    %299 = vmatpush.msra.mxu0 0.0
    %300 = vmatpush.msra.mxu0 0.0
    %301 = vmatpush.msra.mxu0 0.0
    %302 = vmatpush.msra.mxu0 0.0
    %303 = vmatpush.msra.mxu0 0.0
    %304 = vmatpush.msra.mxu0 0.0
    %v305 = vand.u32 %v124, 4294901760
    %306 = vmatpush.msra.mxu0 %v305
    %v307 = vand.u32 %v123, 4294901760
    %308 = vmatpush.msra.mxu0 %v307
    %v309 = vand.u32 %v122, 4294901760
    %310 = vmatpush.msra.mxu0 %v309
    %v311 = vand.u32 %v121, 4294901760
    %312 = vmatpush.msra.mxu0 %v311
    %v313 = vand.u32 %v131, 4294901760
    %314 = vmatmul.f32.gmra.mxu0 %v313
    %v315 = vpop.f32.mrf.mxu0
    %v316 = vadd.f32 %v291, %v315
    %317 = vdwg.mxu0
    %v318 = vtanh.pop %v316
    %v319 = vld [vmem:[#allocation7] sm:$0xff]
    %v320 = vld [vmem:[#allocation7 + $0x8] sm:$0xff]
    %v321 = vld [vmem:[#allocation7 + $0x10] sm:$0xff]
    %v322 = vld [vmem:[#allocation7 + $0x18] sm:$0xff]
    %v323 = vld [vmem:[#allocation7 + $0x20] sm:$0xff]
    %v324 = vld [vmem:[#allocation7 + $0x28] sm:$0xff]
    %v325 = vld [vmem:[#allocation7 + $0x30] sm:$0xff]
    %v326 = vld [vmem:[#allocation7 + $0x38] sm:$0xff]
    %v327 = vld [vmem:[%s4] sm:$0x1]
    %v329 = vperm.slane %v327, 0
    %vm331 = vcmask 523264
    %v333 = vsel %vm331, %v318, 0
    %335 = vmatpush.msra.mxu0 0.0
    %336 = vmatpush.msra.mxu0 0.0
    %337 = vmatpush.msra.mxu0 0.0
    %338 = vmatpush.msra.mxu0 0.0
    %339 = vmatpush.msra.mxu0 0.0
    %340 = vmatpush.msra.mxu0 0.0
    %341 = vmatpush.msra.mxu0 0.0
    %342 = vmatpush.msra.mxu0 0.0
    %v343 = vand.u32 %v326, 4294901760
    %344 = vmatpush.msra.mxu0 %v343
    %v345 = vand.u32 %v325, 4294901760
    %346 = vmatpush.msra.mxu0 %v345
    %v347 = vand.u32 %v324, 4294901760
    %348 = vmatpush.msra.mxu0 %v347
    %v349 = vand.u32 %v323, 4294901760
    %350 = vmatpush.msra.mxu0 %v349
    %v351 = vand.u32 %v322, 4294901760
    %352 = vmatpush.msra.mxu0 %v351
    %v353 = vand.u32 %v321, 4294901760
    %354 = vmatpush.msra.mxu0 %v353
    %v355 = vand.u32 %v320, 4294901760
    %356 = vmatpush.msra.mxu0 %v355
    %v357 = vand.u32 %v319, 4294901760
    %358 = vmatpush.msra.mxu0 %v357
    %v359 = vand.u32 %v333, 4294901760
    %v360 = vsub.f32 %v333, %v359
    %v361 = vand.u32 %v360, 4294901760
    %v362 = vsub.f32 %v360, %v361
    %v363 = vand.u32 %v362, 4294901760
    %364 = vmatmul.f32.gmra.mxu0 %v363
    %v365 = vpop.f32.mrf.mxu0
    %v366 = vadd.f32 %v329, %v365
    %367 = vdwg.mxu0
    %368 = vmatpush.msra.mxu0 0.0
    %369 = vmatpush.msra.mxu0 0.0
    %370 = vmatpush.msra.mxu0 0.0
    %371 = vmatpush.msra.mxu0 0.0
    %372 = vmatpush.msra.mxu0 0.0
    %373 = vmatpush.msra.mxu0 0.0
    %374 = vmatpush.msra.mxu0 0.0
    %375 = vmatpush.msra.mxu0 0.0
    %v376 = vand.u32 %v326, 4294901760
    %v377 = vsub.f32 %v326, %v376
    %v378 = vand.u32 %v377, 4294901760
    %v379 = vsub.f32 %v377, %v378
    %v380 = vand.u32 %v379, 4294901760
    %381 = vmatpush.msra.mxu0 %v380
    %v382 = vand.u32 %v325, 4294901760
    %v383 = vsub.f32 %v325, %v382
    %v384 = vand.u32 %v383, 4294901760
    %v385 = vsub.f32 %v383, %v384
    %v386 = vand.u32 %v385, 4294901760
    %387 = vmatpush.msra.mxu0 %v386
    %v388 = vand.u32 %v324, 4294901760
    %v389 = vsub.f32 %v324, %v388
    %v390 = vand.u32 %v389, 4294901760
    %v391 = vsub.f32 %v389, %v390
    %v392 = vand.u32 %v391, 4294901760
    %393 = vmatpush.msra.mxu0 %v392
    %v394 = vand.u32 %v323, 4294901760
    %v395 = vsub.f32 %v323, %v394
    %v396 = vand.u32 %v395, 4294901760
    %v397 = vsub.f32 %v395, %v396
    %v398 = vand.u32 %v397, 4294901760
    %399 = vmatpush.msra.mxu0 %v398
    %v400 = vand.u32 %v322, 4294901760
    %v401 = vsub.f32 %v322, %v400
    %v402 = vand.u32 %v401, 4294901760
    %v403 = vsub.f32 %v401, %v402
    %v404 = vand.u32 %v403, 4294901760
    %405 = vmatpush.msra.mxu0 %v404
    %v406 = vand.u32 %v321, 4294901760
    %v407 = vsub.f32 %v321, %v406
    %v408 = vand.u32 %v407, 4294901760
    %v409 = vsub.f32 %v407, %v408
    %v410 = vand.u32 %v409, 4294901760
    %411 = vmatpush.msra.mxu0 %v410
    %v412 = vand.u32 %v320, 4294901760
    %v413 = vsub.f32 %v320, %v412
    %v414 = vand.u32 %v413, 4294901760
    %v415 = vsub.f32 %v413, %v414
    %v416 = vand.u32 %v415, 4294901760
    %417 = vmatpush.msra.mxu0 %v416
    %v418 = vand.u32 %v319, 4294901760
    %v419 = vsub.f32 %v319, %v418
    %v420 = vand.u32 %v419, 4294901760
    %v421 = vsub.f32 %v419, %v420
    %v422 = vand.u32 %v421, 4294901760
    %423 = vmatpush.msra.mxu0 %v422
    %v424 = vand.u32 %v333, 4294901760
    %425 = vmatmul.f32.gmra.mxu0 %v424
    %v426 = vpop.f32.mrf.mxu0
    %v427 = vadd.f32 %v366, %v426
    %428 = vdwg.mxu0
    %429 = vmatpush.msra.mxu0 0.0
    %430 = vmatpush.msra.mxu0 0.0
    %431 = vmatpush.msra.mxu0 0.0
    %432 = vmatpush.msra.mxu0 0.0
    %433 = vmatpush.msra.mxu0 0.0
    %434 = vmatpush.msra.mxu0 0.0
    %435 = vmatpush.msra.mxu0 0.0
    %436 = vmatpush.msra.mxu0 0.0
    %v437 = vand.u32 %v326, 4294901760
    %v438 = vsub.f32 %v326, %v437
    %439 = vmatpush.msra.mxu0 %v438
    %v440 = vand.u32 %v325, 4294901760
    %v441 = vsub.f32 %v325, %v440
    %442 = vmatpush.msra.mxu0 %v441
    %v443 = vand.u32 %v324, 4294901760
    %v444 = vsub.f32 %v324, %v443
    %445 = vmatpush.msra.mxu0 %v444
    %v446 = vand.u32 %v323, 4294901760
    %v447 = vsub.f32 %v323, %v446
    %448 = vmatpush.msra.mxu0 %v447
    %v449 = vand.u32 %v322, 4294901760
    %v450 = vsub.f32 %v322, %v449
    %451 = vmatpush.msra.mxu0 %v450
    %v452 = vand.u32 %v321, 4294901760
    %v453 = vsub.f32 %v321, %v452
    %454 = vmatpush.msra.mxu0 %v453
    %v455 = vand.u32 %v320, 4294901760
    %v456 = vsub.f32 %v320, %v455
    %457 = vmatpush.msra.mxu0 %v456
    %v458 = vand.u32 %v319, 4294901760
    %v459 = vsub.f32 %v319, %v458
    %460 = vmatpush.msra.mxu0 %v459
    %v461 = vand.u32 %v333, 4294901760
    %v462 = vsub.f32 %v333, %v461
    %463 = vmatmul.f32.gmra.mxu0 %v462
    %v464 = vpop.f32.mrf.mxu0
    %v465 = vadd.f32 %v427, %v464
    %466 = vdwg.mxu0
    %467 = vmatpush.msra.mxu0 0.0
    %468 = vmatpush.msra.mxu0 0.0
    %469 = vmatpush.msra.mxu0 0.0
    %470 = vmatpush.msra.mxu0 0.0
    %471 = vmatpush.msra.mxu0 0.0
    %472 = vmatpush.msra.mxu0 0.0
    %473 = vmatpush.msra.mxu0 0.0
    %474 = vmatpush.msra.mxu0 0.0
    %v475 = vand.u32 %v326, 4294901760
    %476 = vmatpush.msra.mxu0 %v475
    %v477 = vand.u32 %v325, 4294901760
    %478 = vmatpush.msra.mxu0 %v477
    %v479 = vand.u32 %v324, 4294901760
    %480 = vmatpush.msra.mxu0 %v479
    %v481 = vand.u32 %v323, 4294901760
    %482 = vmatpush.msra.mxu0 %v481
    %v483 = vand.u32 %v322, 4294901760
    %484 = vmatpush.msra.mxu0 %v483
    %v485 = vand.u32 %v321, 4294901760
    %486 = vmatpush.msra.mxu0 %v485
    %v487 = vand.u32 %v320, 4294901760
    %488 = vmatpush.msra.mxu0 %v487
    %v489 = vand.u32 %v319, 4294901760
    %490 = vmatpush.msra.mxu0 %v489
    %v491 = vand.u32 %v333, 4294901760
    %v492 = vsub.f32 %v333, %v491
    %v493 = vand.u32 %v492, 4294901760
    %494 = vmatmul.f32.gmra.mxu0 %v493
    %v495 = vpop.f32.mrf.mxu0
    %v496 = vadd.f32 %v465, %v495
    %497 = vdwg.mxu0
    %498 = vmatpush.msra.mxu0 0.0
    %499 = vmatpush.msra.mxu0 0.0
    %500 = vmatpush.msra.mxu0 0.0
    %501 = vmatpush.msra.mxu0 0.0
    %502 = vmatpush.msra.mxu0 0.0
    %503 = vmatpush.msra.mxu0 0.0
    %504 = vmatpush.msra.mxu0 0.0
    %505 = vmatpush.msra.mxu0 0.0
    %v506 = vand.u32 %v326, 4294901760
    %v507 = vsub.f32 %v326, %v506
    %v508 = vand.u32 %v507, 4294901760
    %509 = vmatpush.msra.mxu0 %v508
    %v510 = vand.u32 %v325, 4294901760
    %v511 = vsub.f32 %v325, %v510
    %v512 = vand.u32 %v511, 4294901760
    %513 = vmatpush.msra.mxu0 %v512
    %v514 = vand.u32 %v324, 4294901760
    %v515 = vsub.f32 %v324, %v514
    %v516 = vand.u32 %v515, 4294901760
    %517 = vmatpush.msra.mxu0 %v516
    %v518 = vand.u32 %v323, 4294901760
    %v519 = vsub.f32 %v323, %v518
    %v520 = vand.u32 %v519, 4294901760
    %521 = vmatpush.msra.mxu0 %v520
    %v522 = vand.u32 %v322, 4294901760
    %v523 = vsub.f32 %v322, %v522
    %v524 = vand.u32 %v523, 4294901760
    %525 = vmatpush.msra.mxu0 %v524
    %v526 = vand.u32 %v321, 4294901760
    %v527 = vsub.f32 %v321, %v526
    %v528 = vand.u32 %v527, 4294901760
    %529 = vmatpush.msra.mxu0 %v528
    %v530 = vand.u32 %v320, 4294901760
    %v531 = vsub.f32 %v320, %v530
    %v532 = vand.u32 %v531, 4294901760
    %533 = vmatpush.msra.mxu0 %v532
    %v534 = vand.u32 %v319, 4294901760
    %v535 = vsub.f32 %v319, %v534
    %v536 = vand.u32 %v535, 4294901760
    %537 = vmatpush.msra.mxu0 %v536
    %v538 = vand.u32 %v333, 4294901760
    %539 = vmatmul.f32.gmra.mxu0 %v538
    %v540 = vpop.f32.mrf.mxu0
    %v541 = vadd.f32 %v496, %v540
    %542 = vdwg.mxu0
    %543 = vmatpush.msra.mxu0 0.0
    %544 = vmatpush.msra.mxu0 0.0
    %545 = vmatpush.msra.mxu0 0.0
    %546 = vmatpush.msra.mxu0 0.0
    %547 = vmatpush.msra.mxu0 0.0
    %548 = vmatpush.msra.mxu0 0.0
    %549 = vmatpush.msra.mxu0 0.0
    %550 = vmatpush.msra.mxu0 0.0
    %v551 = vand.u32 %v326, 4294901760
    %552 = vmatpush.msra.mxu0 %v551
    %v553 = vand.u32 %v325, 4294901760
    %554 = vmatpush.msra.mxu0 %v553
    %v555 = vand.u32 %v324, 4294901760
    %556 = vmatpush.msra.mxu0 %v555
    %v557 = vand.u32 %v323, 4294901760
    %558 = vmatpush.msra.mxu0 %v557
    %v559 = vand.u32 %v322, 4294901760
    %560 = vmatpush.msra.mxu0 %v559
    %v561 = vand.u32 %v321, 4294901760
    %562 = vmatpush.msra.mxu0 %v561
    %v563 = vand.u32 %v320, 4294901760
    %564 = vmatpush.msra.mxu0 %v563
    %v565 = vand.u32 %v319, 4294901760
    %566 = vmatpush.msra.mxu0 %v565
    %v567 = vand.u32 %v333, 4294901760
    %568 = vmatmul.f32.gmra.mxu0 %v567
    %v569 = vpop.f32.mrf.mxu0
    %v570 = vadd.f32 %v541, %v569
    %571 = vdwg.mxu0
    %v572 = vmax.f32 %v570, 0.0
    %v573 = vand.u32 2147483647, %v570
    %v574 = vsub.f32 0.0, %v573
    %v575 = vmul.f32 %v574, 1.442695
    %v576 = vpow.pop %v575
    %v577 = vadd.f32 %v576, 1.0
    %v578 = vlog2.pop %v577
    %v579 = vmul.f32 %v578, 0.6931472
    %v580 = vmul.f32 -0.5, %v576
    %v581 = vadd.f32 %v580, 1.0
    %v582 = vmul.f32 %v581, %v576
    %v583 = vand.u32 2147483647, %v576
    %vm584 = vcmp.lt.f32.partialorder %v583, 0.0004427343
    %v585 = vsel %vm584, %v582, %v579
    %v586 = vadd.f32 %v572, %v585
    %v587 = vld [vmem:[#allocation8] sm:$0xff]
    %v588 = vadd.f32 %v587, 1e-10
    %v589 = vlog2.pop %v588
    %v590 = vmul.f32 %v589, 0.6931472
    %v591 = vsub.f32 0.0, %v590
    %v592 = vadd.f32 %v591, 1e-10
    %v593 = vlog2.pop %v592
    %v594 = vmul.f32 %v593, 0.6931472
    %v595 = vsub.f32 0.0, %v594
    %v596 = vadd.f32 %v586, %v595
    %v597 = vmul.f32 %v596, 10.0
    %599 = vrot.lane.b32.xlu0 %v597, 120
    %v600 = vpop.permute.xlu0 %599
    %602 = vrot.lane.b32.xlu0 %v597, 112
    %v603 = vpop.permute.xlu0 %602
    %605 = vrot.lane.b32.xlu0 %v597, 104
    %v606 = vpop.permute.xlu0 %605
    %608 = vrot.lane.b32.xlu0 %v597, 96
    %v609 = vpop.permute.xlu0 %608
    %611 = vrot.lane.b32.xlu0 %v597, 88
    %v612 = vpop.permute.xlu0 %611
    %614 = vrot.lane.b32.xlu0 %v597, 80
    %v615 = vpop.permute.xlu0 %614
    %617 = vrot.lane.b32.xlu0 %v597, 72
    %v618 = vpop.permute.xlu0 %617
    %620 = vrot.lane.b32.xlu0 %v597, 64
    %v621 = vpop.permute.xlu0 %620
    %623 = vrot.lane.b32.xlu0 %v597, 56
    %v624 = vpop.permute.xlu0 %623
    %626 = vrot.lane.b32.xlu0 %v597, 48
    %v627 = vpop.permute.xlu0 %626
    %629 = vrot.lane.b32.xlu0 %v597, 40
    %v630 = vpop.permute.xlu0 %629
    %632 = vrot.lane.b32.xlu0 %v597, 32
    %v633 = vpop.permute.xlu0 %632
    %635 = vrot.lane.b32.xlu0 %v597, 24
    %v636 = vpop.permute.xlu0 %635
    %638 = vrot.lane.b32.xlu0 %v597, 16
    %v639 = vpop.permute.xlu0 %638
    %641 = vrot.lane.b32.xlu0 %v597, 8
    %v642 = vpop.permute.xlu0 %641
    %v644 = vrot.slane %v603, 4
    %vm645 = vcmask 1047556
    %v646 = vsel %vm645, %v644, %v597
    %v647 = vrot.slane %v597, 4
    %v648 = vsel %vm645, %v603, %v647
    %v650 = vunpack.c.l.s4 1983009808
    %v651 = vunpack.c.0.s8 %v650
    %v652 = vperm.slane %v646, %v651
    %v654 = vunpack.c.l.s4 1983009808
    %v655 = vunpack.c.0.s8 %v654
    %v656 = vperm.slane %v648, %v655
    %v657 = vrot.slane %v606, 4
    %v658 = vsel %vm645, %v657, %v600
    %v659 = vrot.slane %v600, 4
    %v660 = vsel %vm645, %v606, %v659
    %v662 = vunpack.c.l.s4 1983009808
    %v663 = vunpack.c.0.s8 %v662
    %v664 = vperm.slane %v658, %v663
    %v666 = vunpack.c.l.s4 1983009808
    %v667 = vunpack.c.0.s8 %v666
    %v668 = vperm.slane %v660, %v667
    %v669 = vrot.slane %v615, 4
    %v670 = vsel %vm645, %v669, %v609
    %v671 = vrot.slane %v609, 4
    %v672 = vsel %vm645, %v615, %v671
    %v674 = vunpack.c.l.s4 1983009808
    %v675 = vunpack.c.0.s8 %v674
    %v676 = vperm.slane %v670, %v675
    %v678 = vunpack.c.l.s4 1983009808
    %v679 = vunpack.c.0.s8 %v678
    %v680 = vperm.slane %v672, %v679
    %v681 = vrot.slane %v618, 4
    %v682 = vsel %vm645, %v681, %v612
    %v683 = vrot.slane %v612, 4
    %v684 = vsel %vm645, %v618, %v683
    %v686 = vunpack.c.l.s4 1983009808
    %v687 = vunpack.c.0.s8 %v686
    %v688 = vperm.slane %v682, %v687
    %v690 = vunpack.c.l.s4 1983009808
    %v691 = vunpack.c.0.s8 %v690
    %v692 = vperm.slane %v684, %v691
    %v693 = vrot.slane %v664, 4
    %v694 = vsel %vm645, %v693, %v652
    %v695 = vrot.slane %v652, 4
    %v696 = vsel %vm645, %v664, %v695
    %v698 = vunpack.c.l.s4 1934713408
    %v699 = vunpack.c.0.s8 %v698
    %v700 = vperm.slane %v694, %v699
    %v702 = vunpack.c.l.s4 1934713408
    %v703 = vunpack.c.0.s8 %v702
    %v704 = vperm.slane %v696, %v703
    %v705 = vrot.slane %v668, 4
    %v706 = vsel %vm645, %v705, %v656
    %v707 = vrot.slane %v656, 4
    %v708 = vsel %vm645, %v668, %v707
    %v710 = vunpack.c.l.s4 1934713408
    %v711 = vunpack.c.0.s8 %v710
    %v712 = vperm.slane %v706, %v711
    %v714 = vunpack.c.l.s4 1934713408
    %v715 = vunpack.c.0.s8 %v714
    %v716 = vperm.slane %v708, %v715
    %v717 = vrot.slane %v688, 4
    %v718 = vsel %vm645, %v717, %v676
    %v719 = vrot.slane %v676, 4
    %v720 = vsel %vm645, %v688, %v719
    %v722 = vunpack.c.l.s4 1934713408
    %v723 = vunpack.c.0.s8 %v722
    %v724 = vperm.slane %v718, %v723
    %v726 = vunpack.c.l.s4 1934713408
    %v727 = vunpack.c.0.s8 %v726
    %v728 = vperm.slane %v720, %v727
    %v729 = vrot.slane %v692, 4
    %v730 = vsel %vm645, %v729, %v680
    %v731 = vrot.slane %v680, 4
    %v732 = vsel %vm645, %v692, %v731
    %v734 = vunpack.c.l.s4 1934713408
    %v735 = vunpack.c.0.s8 %v734
    %v736 = vperm.slane %v730, %v735
    %v738 = vunpack.c.l.s4 1934713408
    %v739 = vunpack.c.0.s8 %v738
    %v740 = vperm.slane %v732, %v739
    %v741 = vrot.slane %v724, 4
    %v742 = vsel %vm645, %v741, %v700
    %v743 = vrot.slane %v700, 4
    %v744 = vsel %vm645, %v724, %v743
    %v745 = vrot.slane %v728, 4
    %v746 = vsel %vm645, %v745, %v704
    %v747 = vrot.slane %v704, 4
    %v748 = vsel %vm645, %v728, %v747
    %v749 = vrot.slane %v736, 4
    %v750 = vsel %vm645, %v749, %v712
    %v751 = vrot.slane %v712, 4
    %v752 = vsel %vm645, %v736, %v751
    %v753 = vrot.slane %v740, 4
    %v754 = vsel %vm645, %v753, %v716
    %v755 = vrot.slane %v716, 4
    %v756 = vsel %vm645, %v740, %v755
    %v757 = vrot.slane %v627, 4
    %v758 = vsel %vm645, %v757, %v621
    %v759 = vrot.slane %v621, 4
    %v760 = vsel %vm645, %v627, %v759
    %v762 = vunpack.c.l.s4 1983009808
    %v763 = vunpack.c.0.s8 %v762
    %v764 = vperm.slane %v758, %v763
    %v766 = vunpack.c.l.s4 1983009808
    %v767 = vunpack.c.0.s8 %v766
    %v768 = vperm.slane %v760, %v767
    %v769 = vrot.slane %v630, 4
    %v770 = vsel %vm645, %v769, %v624
    %v771 = vrot.slane %v624, 4
    %v772 = vsel %vm645, %v630, %v771
    %v774 = vunpack.c.l.s4 1983009808
    %v775 = vunpack.c.0.s8 %v774
    %v776 = vperm.slane %v770, %v775
    %v778 = vunpack.c.l.s4 1983009808
    %v779 = vunpack.c.0.s8 %v778
    %v780 = vperm.slane %v772, %v779
    %v781 = vrot.slane %v639, 4
    %v782 = vsel %vm645, %v781, %v633
    %v783 = vrot.slane %v633, 4
    %v784 = vsel %vm645, %v639, %v783
    %v786 = vunpack.c.l.s4 1983009808
    %v787 = vunpack.c.0.s8 %v786
    %v788 = vperm.slane %v782, %v787
    %v790 = vunpack.c.l.s4 1983009808
    %v791 = vunpack.c.0.s8 %v790
    %v792 = vperm.slane %v784, %v791
    %v793 = vrot.slane %v642, 4
    %v794 = vsel %vm645, %v793, %v636
    %v795 = vrot.slane %v636, 4
    %v796 = vsel %vm645, %v642, %v795
    %v798 = vunpack.c.l.s4 1983009808
    %v799 = vunpack.c.0.s8 %v798
    %v800 = vperm.slane %v794, %v799
    %v802 = vunpack.c.l.s4 1983009808
    %v803 = vunpack.c.0.s8 %v802
    %v804 = vperm.slane %v796, %v803
    %v805 = vrot.slane %v776, 4
    %v806 = vsel %vm645, %v805, %v764
    %v807 = vrot.slane %v764, 4
    %v808 = vsel %vm645, %v776, %v807
    %v810 = vunpack.c.l.s4 1934713408
    %v811 = vunpack.c.0.s8 %v810
    %v812 = vperm.slane %v806, %v811
    %v814 = vunpack.c.l.s4 1934713408
    %v815 = vunpack.c.0.s8 %v814
    %v816 = vperm.slane %v808, %v815
    %v817 = vrot.slane %v780, 4
    %v818 = vsel %vm645, %v817, %v768
    %v819 = vrot.slane %v768, 4
    %v820 = vsel %vm645, %v780, %v819
    %v822 = vunpack.c.l.s4 1934713408
    %v823 = vunpack.c.0.s8 %v822
    %v824 = vperm.slane %v818, %v823
    %v826 = vunpack.c.l.s4 1934713408
    %v827 = vunpack.c.0.s8 %v826
    %v828 = vperm.slane %v820, %v827
    %v829 = vrot.slane %v800, 4
    %v830 = vsel %vm645, %v829, %v788
    %v831 = vrot.slane %v788, 4
    %v832 = vsel %vm645, %v800, %v831
    %v834 = vunpack.c.l.s4 1934713408
    %v835 = vunpack.c.0.s8 %v834
    %v836 = vperm.slane %v830, %v835
    %v838 = vunpack.c.l.s4 1934713408
    %v839 = vunpack.c.0.s8 %v838
    %v840 = vperm.slane %v832, %v839
    %v841 = vrot.slane %v804, 4
    %v842 = vsel %vm645, %v841, %v792
    %v843 = vrot.slane %v792, 4
    %v844 = vsel %vm645, %v804, %v843
    %v846 = vunpack.c.l.s4 1934713408
    %v847 = vunpack.c.0.s8 %v846
    %v848 = vperm.slane %v842, %v847
    %v850 = vunpack.c.l.s4 1934713408
    %v851 = vunpack.c.0.s8 %v850
    %v852 = vperm.slane %v844, %v851
    %v853 = vrot.slane %v836, 4
    %v854 = vsel %vm645, %v853, %v812
    %v855 = vrot.slane %v812, 4
    %v856 = vsel %vm645, %v836, %v855
    %v857 = vrot.slane %v840, 4
    %v858 = vsel %vm645, %v857, %v816
    %v859 = vrot.slane %v816, 4
    %v860 = vsel %vm645, %v840, %v859
    %v861 = vrot.slane %v848, 4
    %v862 = vsel %vm645, %v861, %v824
    %v863 = vrot.slane %v824, 4
    %v864 = vsel %vm645, %v848, %v863
    %v865 = vrot.slane %v852, 4
    %v866 = vsel %vm645, %v865, %v828
    %v867 = vrot.slane %v828, 4
    %v868 = vsel %vm645, %v852, %v867
    %vm869 = vcmask 64512
    %v870 = vsel %vm869, %v742, -inf
    %871 = vmax.xlane.f32.xlu0 %v870
    %v872 = vpop.xlane.xlu0 %871
    %v873 = vsel %vm869, %v854, -inf
    %874 = vmax.xlane.f32.xlu0 %v873
    %v875 = vpop.xlane.xlu0 %874
    %v876 = vsel %vm869, %v744, -inf
    %877 = vmax.xlane.f32.xlu0 %v876
    %v878 = vpop.xlane.xlu0 %877
    %v879 = vsel %vm869, %v856, -inf
    %880 = vmax.xlane.f32.xlu0 %v879
    %v881 = vpop.xlane.xlu0 %880
    %v882 = vsel %vm869, %v746, -inf
    %883 = vmax.xlane.f32.xlu0 %v882
    %v884 = vpop.xlane.xlu0 %883
    %v885 = vsel %vm869, %v858, -inf
    %886 = vmax.xlane.f32.xlu0 %v885
    %v887 = vpop.xlane.xlu0 %886
    %v888 = vsel %vm869, %v748, -inf
    %889 = vmax.xlane.f32.xlu0 %v888
    %v890 = vpop.xlane.xlu0 %889
    %v891 = vsel %vm869, %v860, -inf
    %892 = vmax.xlane.f32.xlu0 %v891
    %v893 = vpop.xlane.xlu0 %892
    %v894 = vsel %vm869, %v750, -inf
    %895 = vmax.xlane.f32.xlu0 %v894
    %v896 = vpop.xlane.xlu0 %895
    %v897 = vsel %vm869, %v862, -inf
    %898 = vmax.xlane.f32.xlu0 %v897
    %v899 = vpop.xlane.xlu0 %898
    %v900 = vsel %vm869, %v752, -inf
    %901 = vmax.xlane.f32.xlu0 %v900
    %v902 = vpop.xlane.xlu0 %901
    %v903 = vsel %vm869, %v864, -inf
    %904 = vmax.xlane.f32.xlu0 %v903
    %v905 = vpop.xlane.xlu0 %904
    %v906 = vsel %vm869, %v754, -inf
    %907 = vmax.xlane.f32.xlu0 %v906
    %v908 = vpop.xlane.xlu0 %907
    %v909 = vsel %vm869, %v866, -inf
    %910 = vmax.xlane.f32.xlu0 %v909
    %v911 = vpop.xlane.xlu0 %910
    %v912 = vsel %vm869, %v756, -inf
    %913 = vmax.xlane.f32.xlu0 %v912
    %v914 = vpop.xlane.xlu0 %913
    %v915 = vsel %vm869, %v868, -inf
    %916 = vmax.xlane.f32.xlu0 %v915
    %v917 = vpop.xlane.xlu0 %916
    %v918 = vld [vmem:[#allocation11] sm:$0xff]
    %v919 = vld [vmem:[#allocation11 + $0x8] sm:$0xff]
    %v936 = vlaneseq
    %v937 = vand.u32 %v936, 127
    %v938 = vperm.slane %v872, %v937
    %v939 = vadd.s32 %v937, 4294967288
    %v940 = vperm.slane %v875, %v939
    %vm941 = vcmask 130112
    %v942 = vsel %vm941, %v940, %v938
    %v943 = vperm.slane %v878, %v937
    %v944 = vperm.slane %v881, %v939
    %v945 = vsel %vm941, %v944, %v943
    %v946 = vperm.slane %v884, %v937
    %v947 = vperm.slane %v887, %v939
    %v948 = vsel %vm941, %v947, %v946
    %v949 = vperm.slane %v890, %v937
    %v950 = vperm.slane %v893, %v939
    %v951 = vsel %vm941, %v950, %v949
    %v952 = vperm.slane %v896, %v937
    %v953 = vperm.slane %v899, %v939
    %v954 = vsel %vm941, %v953, %v952
    %v955 = vperm.slane %v902, %v937
    %v956 = vperm.slane %v905, %v939
    %v957 = vsel %vm941, %v956, %v955
    %v958 = vperm.slane %v908, %v937
    %v959 = vperm.slane %v911, %v939
    %v960 = vsel %vm941, %v959, %v958
    %v961 = vperm.slane %v914, %v937
    %v962 = vperm.slane %v917, %v939
    %v963 = vsel %vm941, %v962, %v961
    %vm964 = vcmask 1041409
    %v965 = vsel %vm964, %v945, %v942
    %vm966 = vcmask 1042434
    %v967 = vsel %vm966, %v948, %v965
    %vm968 = vcmask 1043459
    %v969 = vsel %vm968, %v951, %v967
    %vm970 = vcmask 1044484
    %v971 = vsel %vm970, %v954, %v969
    %vm972 = vcmask 1045509
    %v973 = vsel %vm972, %v957, %v971
    %vm974 = vcmask 1046534
    %v975 = vsel %vm974, %v960, %v973
    %vm976 = vcmask 1047559
    %v977 = vsel %vm976, %v963, %v975
    %vm978 = vcmask 130048
    %v979 = vsel %vm978, %v977, 0
    %981 = vmatpush.msra.mxu0 0.0
    %982 = vmatpush.msra.mxu0 0.0
    %983 = vmatpush.msra.mxu0 0.0
    %984 = vmatpush.msra.mxu0 0.0
    %985 = vmatpush.msra.mxu0 0.0
    %986 = vmatpush.msra.mxu0 0.0
    %987 = vmatpush.msra.mxu0 0.0
    %988 = vmatpush.msra.mxu0 0.0
    %989 = vmatpush.msra.mxu0 0.0
    %990 = vmatpush.msra.mxu0 0.0
    %991 = vmatpush.msra.mxu0 0.0
    %992 = vmatpush.msra.mxu0 0.0
    %993 = vmatpush.msra.mxu0 0.0
    %994 = vmatpush.msra.mxu0 0.0
    %v995 = vand.u32 %v919, 4294901760
    %996 = vmatpush.msra.mxu0 %v995
    %v997 = vand.u32 %v918, 4294901760
    %998 = vmatpush.msra.mxu0 %v997
    %v999 = vand.u32 %v979, 4294901760
    %v1000 = vsub.f32 %v979, %v999
    %v1001 = vand.u32 %v1000, 4294901760
    %v1002 = vsub.f32 %v1000, %v1001
    %v1003 = vand.u32 %v1002, 4294901760
    %1004 = vmatmul.f32.gmra.mxu0 %v1003
    %v1005 = vpop.f32.mrf.mxu0
    %v1006 = vadd.f32 0.0, %v1005
    %1007 = vdwg.mxu0
    %1008 = vmatpush.msra.mxu0 0.0
    %1009 = vmatpush.msra.mxu0 0.0
    %1010 = vmatpush.msra.mxu0 0.0
    %1011 = vmatpush.msra.mxu0 0.0
    %1012 = vmatpush.msra.mxu0 0.0
    %1013 = vmatpush.msra.mxu0 0.0
    %1014 = vmatpush.msra.mxu0 0.0
    %1015 = vmatpush.msra.mxu0 0.0
    %1016 = vmatpush.msra.mxu0 0.0
    %1017 = vmatpush.msra.mxu0 0.0
    %1018 = vmatpush.msra.mxu0 0.0
    %1019 = vmatpush.msra.mxu0 0.0
    %1020 = vmatpush.msra.mxu0 0.0
    %1021 = vmatpush.msra.mxu0 0.0
    %v1022 = vand.u32 %v919, 4294901760
    %v1023 = vsub.f32 %v919, %v1022
    %v1024 = vand.u32 %v1023, 4294901760
    %v1025 = vsub.f32 %v1023, %v1024
    %v1026 = vand.u32 %v1025, 4294901760
    %1027 = vmatpush.msra.mxu0 %v1026
    %v1028 = vand.u32 %v918, 4294901760
    %v1029 = vsub.f32 %v918, %v1028
    %v1030 = vand.u32 %v1029, 4294901760
    %v1031 = vsub.f32 %v1029, %v1030
    %v1032 = vand.u32 %v1031, 4294901760
    %1033 = vmatpush.msra.mxu0 %v1032
    %v1034 = vand.u32 %v979, 4294901760
    %1035 = vmatmul.f32.gmra.mxu0 %v1034
    %v1036 = vpop.f32.mrf.mxu0
    %v1037 = vadd.f32 %v1006, %v1036
    %1038 = vdwg.mxu0
    %1039 = vmatpush.msra.mxu0 0.0
    %1040 = vmatpush.msra.mxu0 0.0
    %1041 = vmatpush.msra.mxu0 0.0
    %1042 = vmatpush.msra.mxu0 0.0
    %1043 = vmatpush.msra.mxu0 0.0
    %1044 = vmatpush.msra.mxu0 0.0
    %1045 = vmatpush.msra.mxu0 0.0
    %1046 = vmatpush.msra.mxu0 0.0
    %1047 = vmatpush.msra.mxu0 0.0
    %1048 = vmatpush.msra.mxu0 0.0
    %1049 = vmatpush.msra.mxu0 0.0
    %1050 = vmatpush.msra.mxu0 0.0
    %1051 = vmatpush.msra.mxu0 0.0
    %1052 = vmatpush.msra.mxu0 0.0
    %v1053 = vand.u32 %v919, 4294901760
    %v1054 = vsub.f32 %v919, %v1053
    %1055 = vmatpush.msra.mxu0 %v1054
    %v1056 = vand.u32 %v918, 4294901760
    %v1057 = vsub.f32 %v918, %v1056
    %1058 = vmatpush.msra.mxu0 %v1057
    %v1059 = vand.u32 %v979, 4294901760
    %v1060 = vsub.f32 %v979, %v1059
    %1061 = vmatmul.f32.gmra.mxu0 %v1060
    %v1062 = vpop.f32.mrf.mxu0
    %v1063 = vadd.f32 %v1037, %v1062
    %1064 = vdwg.mxu0
    %1065 = vmatpush.msra.mxu0 0.0
    %1066 = vmatpush.msra.mxu0 0.0
    %1067 = vmatpush.msra.mxu0 0.0
    %1068 = vmatpush.msra.mxu0 0.0
    %1069 = vmatpush.msra.mxu0 0.0
    %1070 = vmatpush.msra.mxu0 0.0
    %1071 = vmatpush.msra.mxu0 0.0
    %1072 = vmatpush.msra.mxu0 0.0
    %1073 = vmatpush.msra.mxu0 0.0
    %1074 = vmatpush.msra.mxu0 0.0
    %1075 = vmatpush.msra.mxu0 0.0
    %1076 = vmatpush.msra.mxu0 0.0
    %1077 = vmatpush.msra.mxu0 0.0
    %1078 = vmatpush.msra.mxu0 0.0
    %v1079 = vand.u32 %v919, 4294901760
    %1080 = vmatpush.msra.mxu0 %v1079
    %v1081 = vand.u32 %v918, 4294901760
    %1082 = vmatpush.msra.mxu0 %v1081
    %v1083 = vand.u32 %v979, 4294901760
    %v1084 = vsub.f32 %v979, %v1083
    %v1085 = vand.u32 %v1084, 4294901760
    %1086 = vmatmul.f32.gmra.mxu0 %v1085
    %v1087 = vpop.f32.mrf.mxu0
    %v1088 = vadd.f32 %v1063, %v1087
    %1089 = vdwg.mxu0
    %1090 = vmatpush.msra.mxu0 0.0
    %1091 = vmatpush.msra.mxu0 0.0
    %1092 = vmatpush.msra.mxu0 0.0
    %1093 = vmatpush.msra.mxu0 0.0
    %1094 = vmatpush.msra.mxu0 0.0
    %1095 = vmatpush.msra.mxu0 0.0
    %1096 = vmatpush.msra.mxu0 0.0
    %1097 = vmatpush.msra.mxu0 0.0
    %1098 = vmatpush.msra.mxu0 0.0
    %1099 = vmatpush.msra.mxu0 0.0
    %1100 = vmatpush.msra.mxu0 0.0
    %1101 = vmatpush.msra.mxu0 0.0
    %1102 = vmatpush.msra.mxu0 0.0
    %1103 = vmatpush.msra.mxu0 0.0
    %v1104 = vand.u32 %v919, 4294901760
    %v1105 = vsub.f32 %v919, %v1104
    %v1106 = vand.u32 %v1105, 4294901760
    %1107 = vmatpush.msra.mxu0 %v1106
    %v1108 = vand.u32 %v918, 4294901760
    %v1109 = vsub.f32 %v918, %v1108
    %v1110 = vand.u32 %v1109, 4294901760
    %1111 = vmatpush.msra.mxu0 %v1110
    %v1112 = vand.u32 %v979, 4294901760
    %1113 = vmatmul.f32.gmra.mxu0 %v1112
    %v1114 = vpop.f32.mrf.mxu0
    %v1115 = vadd.f32 %v1088, %v1114
    %1116 = vdwg.mxu0
    %1117 = vmatpush.msra.mxu0 0.0
    %1118 = vmatpush.msra.mxu0 0.0
    %1119 = vmatpush.msra.mxu0 0.0
    %1120 = vmatpush.msra.mxu0 0.0
    %1121 = vmatpush.msra.mxu0 0.0
    %1122 = vmatpush.msra.mxu0 0.0
    %1123 = vmatpush.msra.mxu0 0.0
    %1124 = vmatpush.msra.mxu0 0.0
    %1125 = vmatpush.msra.mxu0 0.0
    %1126 = vmatpush.msra.mxu0 0.0
    %1127 = vmatpush.msra.mxu0 0.0
    %1128 = vmatpush.msra.mxu0 0.0
    %1129 = vmatpush.msra.mxu0 0.0
    %1130 = vmatpush.msra.mxu0 0.0
    %v1131 = vand.u32 %v919, 4294901760
    %1132 = vmatpush.msra.mxu0 %v1131
    %v1133 = vand.u32 %v918, 4294901760
    %1134 = vmatpush.msra.mxu0 %v1133
    %v1135 = vand.u32 %v979, 4294901760
    %1136 = vmatmul.f32.gmra.mxu0 %v1135
    %v1137 = vpop.f32.mrf.mxu0
    %v1138 = vadd.f32 %v1115, %v1137
    %1139 = vdwg.mxu0
    %v1140 = vsub.f32 %v597, %v1138
    %v1141 = vmul.f32 %v1140, 1.442695
    %v1142 = vpow.pop %v1141
    %v1143 = vld [vmem:[#allocation10] sm:$0xff]
    %v1144 = vld [vmem:[#allocation10 + $0x8] sm:$0xff]
    %v1145 = vld [vmem:[#allocation10 + $0x10] sm:$0xff]
    %v1146 = vld [vmem:[#allocation10 + $0x18] sm:$0xff]
    %v1147 = vld [vmem:[#allocation10 + $0x20] sm:$0xff]
    %v1148 = vld [vmem:[#allocation10 + $0x28] sm:$0xff]
    %v1149 = vld [vmem:[#allocation10 + $0x30] sm:$0xff]
    %v1150 = vld [vmem:[#allocation10 + $0x38] sm:$0xff]
    %v1151 = vld [vmem:[#allocation10 + $0x40] sm:$0xff]
    %v1152 = vld [vmem:[#allocation10 + $0x48] sm:$0xff]
    %v1153 = vld [vmem:[#allocation10 + $0x50] sm:$0xff]
    %v1154 = vld [vmem:[#allocation10 + $0x58] sm:$0xff]
    %v1155 = vld [vmem:[#allocation10 + $0x60] sm:$0xff]
    %v1156 = vld [vmem:[#allocation10 + $0x68] sm:$0xff]
    %v1157 = vld [vmem:[#allocation10 + $0x70] sm:$0xff]
    %v1158 = vld [vmem:[#allocation10 + $0x78] sm:$0xff]
    %v1159 = vand.u32 %v1158, 4294901760
    %1160 = vmatpush.msra.mxu0 %v1159
    %v1161 = vand.u32 %v1157, 4294901760
    %1162 = vmatpush.msra.mxu0 %v1161
    %v1163 = vand.u32 %v1156, 4294901760
    %1164 = vmatpush.msra.mxu0 %v1163
    %v1165 = vand.u32 %v1155, 4294901760
    %1166 = vmatpush.msra.mxu0 %v1165
    %v1167 = vand.u32 %v1154, 4294901760
    %1168 = vmatpush.msra.mxu0 %v1167
    %v1169 = vand.u32 %v1153, 4294901760
    %1170 = vmatpush.msra.mxu0 %v1169
    %v1171 = vand.u32 %v1152, 4294901760
    %1172 = vmatpush.msra.mxu0 %v1171
    %v1173 = vand.u32 %v1151, 4294901760
    %1174 = vmatpush.msra.mxu0 %v1173
    %v1175 = vand.u32 %v1150, 4294901760
    %1176 = vmatpush.msra.mxu0 %v1175
    %v1177 = vand.u32 %v1149, 4294901760
    %1178 = vmatpush.msra.mxu0 %v1177
    %v1179 = vand.u32 %v1148, 4294901760
    %1180 = vmatpush.msra.mxu0 %v1179
    %v1181 = vand.u32 %v1147, 4294901760
    %1182 = vmatpush.msra.mxu0 %v1181
    %v1183 = vand.u32 %v1146, 4294901760
    %1184 = vmatpush.msra.mxu0 %v1183
    %v1185 = vand.u32 %v1145, 4294901760
    %1186 = vmatpush.msra.mxu0 %v1185
    %v1187 = vand.u32 %v1144, 4294901760
    %1188 = vmatpush.msra.mxu0 %v1187
    %v1189 = vand.u32 %v1143, 4294901760
    %1190 = vmatpush.msra.mxu0 %v1189
    %v1191 = vand.u32 %v1142, 4294901760
    %v1192 = vsub.f32 %v1142, %v1191
    %v1193 = vand.u32 %v1192, 4294901760
    %v1194 = vsub.f32 %v1192, %v1193
    %v1195 = vand.u32 %v1194, 4294901760
    %1196 = vmatmul.f32.gmra.mxu0 %v1195
    %v1197 = vpop.f32.mrf.mxu0
    %v1198 = vadd.f32 0.0, %v1197
    %1199 = vdwg.mxu0
    %v1200 = vand.u32 %v1158, 4294901760
    %v1201 = vsub.f32 %v1158, %v1200
    %v1202 = vand.u32 %v1201, 4294901760
    %v1203 = vsub.f32 %v1201, %v1202
    %v1204 = vand.u32 %v1203, 4294901760
    %1205 = vmatpush.msra.mxu0 %v1204
    %v1206 = vand.u32 %v1157, 4294901760
    %v1207 = vsub.f32 %v1157, %v1206
    %v1208 = vand.u32 %v1207, 4294901760
    %v1209 = vsub.f32 %v1207, %v1208
    %v1210 = vand.u32 %v1209, 4294901760
    %1211 = vmatpush.msra.mxu0 %v1210
    %v1212 = vand.u32 %v1156, 4294901760
    %v1213 = vsub.f32 %v1156, %v1212
    %v1214 = vand.u32 %v1213, 4294901760
    %v1215 = vsub.f32 %v1213, %v1214
    %v1216 = vand.u32 %v1215, 4294901760
    %1217 = vmatpush.msra.mxu0 %v1216
    %v1218 = vand.u32 %v1155, 4294901760
    %v1219 = vsub.f32 %v1155, %v1218
    %v1220 = vand.u32 %v1219, 4294901760
    %v1221 = vsub.f32 %v1219, %v1220
    %v1222 = vand.u32 %v1221, 4294901760
    %1223 = vmatpush.msra.mxu0 %v1222
    %v1224 = vand.u32 %v1154, 4294901760
    %v1225 = vsub.f32 %v1154, %v1224
    %v1226 = vand.u32 %v1225, 4294901760
    %v1227 = vsub.f32 %v1225, %v1226
    %v1228 = vand.u32 %v1227, 4294901760
    %1229 = vmatpush.msra.mxu0 %v1228
    %v1230 = vand.u32 %v1153, 4294901760
    %v1231 = vsub.f32 %v1153, %v1230
    %v1232 = vand.u32 %v1231, 4294901760
    %v1233 = vsub.f32 %v1231, %v1232
    %v1234 = vand.u32 %v1233, 4294901760
    %1235 = vmatpush.msra.mxu0 %v1234
    %v1236 = vand.u32 %v1152, 4294901760
    %v1237 = vsub.f32 %v1152, %v1236
    %v1238 = vand.u32 %v1237, 4294901760
    %v1239 = vsub.f32 %v1237, %v1238
    %v1240 = vand.u32 %v1239, 4294901760
    %1241 = vmatpush.msra.mxu0 %v1240
    %v1242 = vand.u32 %v1151, 4294901760
    %v1243 = vsub.f32 %v1151, %v1242
    %v1244 = vand.u32 %v1243, 4294901760
    %v1245 = vsub.f32 %v1243, %v1244
    %v1246 = vand.u32 %v1245, 4294901760
    %1247 = vmatpush.msra.mxu0 %v1246
    %v1248 = vand.u32 %v1150, 4294901760
    %v1249 = vsub.f32 %v1150, %v1248
    %v1250 = vand.u32 %v1249, 4294901760
    %v1251 = vsub.f32 %v1249, %v1250
    %v1252 = vand.u32 %v1251, 4294901760
    %1253 = vmatpush.msra.mxu0 %v1252
    %v1254 = vand.u32 %v1149, 4294901760
    %v1255 = vsub.f32 %v1149, %v1254
    %v1256 = vand.u32 %v1255, 4294901760
    %v1257 = vsub.f32 %v1255, %v1256
    %v1258 = vand.u32 %v1257, 4294901760
    %1259 = vmatpush.msra.mxu0 %v1258
    %v1260 = vand.u32 %v1148, 4294901760
    %v1261 = vsub.f32 %v1148, %v1260
    %v1262 = vand.u32 %v1261, 4294901760
    %v1263 = vsub.f32 %v1261, %v1262
    %v1264 = vand.u32 %v1263, 4294901760
    %1265 = vmatpush.msra.mxu0 %v1264
    %v1266 = vand.u32 %v1147, 4294901760
    %v1267 = vsub.f32 %v1147, %v1266
    %v1268 = vand.u32 %v1267, 4294901760
    %v1269 = vsub.f32 %v1267, %v1268
    %v1270 = vand.u32 %v1269, 4294901760
    %1271 = vmatpush.msra.mxu0 %v1270
    %v1272 = vand.u32 %v1146, 4294901760
    %v1273 = vsub.f32 %v1146, %v1272
    %v1274 = vand.u32 %v1273, 4294901760
    %v1275 = vsub.f32 %v1273, %v1274
    %v1276 = vand.u32 %v1275, 4294901760
    %1277 = vmatpush.msra.mxu0 %v1276
    %v1278 = vand.u32 %v1145, 4294901760
    %v1279 = vsub.f32 %v1145, %v1278
    %v1280 = vand.u32 %v1279, 4294901760
    %v1281 = vsub.f32 %v1279, %v1280
    %v1282 = vand.u32 %v1281, 4294901760
    %1283 = vmatpush.msra.mxu0 %v1282
    %v1284 = vand.u32 %v1144, 4294901760
    %v1285 = vsub.f32 %v1144, %v1284
    %v1286 = vand.u32 %v1285, 4294901760
    %v1287 = vsub.f32 %v1285, %v1286
    %v1288 = vand.u32 %v1287, 4294901760
    %1289 = vmatpush.msra.mxu0 %v1288
    %v1290 = vand.u32 %v1143, 4294901760
    %v1291 = vsub.f32 %v1143, %v1290
    %v1292 = vand.u32 %v1291, 4294901760
    %v1293 = vsub.f32 %v1291, %v1292
    %v1294 = vand.u32 %v1293, 4294901760
    %1295 = vmatpush.msra.mxu0 %v1294
    %v1296 = vand.u32 %v1142, 4294901760
    %1297 = vmatmul.f32.gmra.mxu0 %v1296
    %v1298 = vpop.f32.mrf.mxu0
    %v1299 = vadd.f32 %v1198, %v1298
    %1300 = vdwg.mxu0
    %v1301 = vand.u32 %v1158, 4294901760
    %v1302 = vsub.f32 %v1158, %v1301
    %1303 = vmatpush.msra.mxu0 %v1302
    %v1304 = vand.u32 %v1157, 4294901760
    %v1305 = vsub.f32 %v1157, %v1304
    %1306 = vmatpush.msra.mxu0 %v1305
    %v1307 = vand.u32 %v1156, 4294901760
    %v1308 = vsub.f32 %v1156, %v1307
    %1309 = vmatpush.msra.mxu0 %v1308
    %v1310 = vand.u32 %v1155, 4294901760
    %v1311 = vsub.f32 %v1155, %v1310
    %1312 = vmatpush.msra.mxu0 %v1311
    %v1313 = vand.u32 %v1154, 4294901760
    %v1314 = vsub.f32 %v1154, %v1313
    %1315 = vmatpush.msra.mxu0 %v1314
    %v1316 = vand.u32 %v1153, 4294901760
    %v1317 = vsub.f32 %v1153, %v1316
    %1318 = vmatpush.msra.mxu0 %v1317
    %v1319 = vand.u32 %v1152, 4294901760
    %v1320 = vsub.f32 %v1152, %v1319
    %1321 = vmatpush.msra.mxu0 %v1320
    %v1322 = vand.u32 %v1151, 4294901760
    %v1323 = vsub.f32 %v1151, %v1322
    %1324 = vmatpush.msra.mxu0 %v1323
    %v1325 = vand.u32 %v1150, 4294901760
    %v1326 = vsub.f32 %v1150, %v1325
    %1327 = vmatpush.msra.mxu0 %v1326
    %v1328 = vand.u32 %v1149, 4294901760
    %v1329 = vsub.f32 %v1149, %v1328
    %1330 = vmatpush.msra.mxu0 %v1329
    %v1331 = vand.u32 %v1148, 4294901760
    %v1332 = vsub.f32 %v1148, %v1331
    %1333 = vmatpush.msra.mxu0 %v1332
    %v1334 = vand.u32 %v1147, 4294901760
    %v1335 = vsub.f32 %v1147, %v1334
    %1336 = vmatpush.msra.mxu0 %v1335
    %v1337 = vand.u32 %v1146, 4294901760
    %v1338 = vsub.f32 %v1146, %v1337
    %1339 = vmatpush.msra.mxu0 %v1338
    %v1340 = vand.u32 %v1145, 4294901760
    %v1341 = vsub.f32 %v1145, %v1340
    %1342 = vmatpush.msra.mxu0 %v1341
    %v1343 = vand.u32 %v1144, 4294901760
    %v1344 = vsub.f32 %v1144, %v1343
    %1345 = vmatpush.msra.mxu0 %v1344
    %v1346 = vand.u32 %v1143, 4294901760
    %v1347 = vsub.f32 %v1143, %v1346
    %1348 = vmatpush.msra.mxu0 %v1347
    %v1349 = vand.u32 %v1142, 4294901760
    %v1350 = vsub.f32 %v1142, %v1349
    %1351 = vmatmul.f32.gmra.mxu0 %v1350
    %v1352 = vpop.f32.mrf.mxu0
    %v1353 = vadd.f32 %v1299, %v1352
    %1354 = vdwg.mxu0
    %v1355 = vand.u32 %v1158, 4294901760
    %1356 = vmatpush.msra.mxu0 %v1355
    %v1357 = vand.u32 %v1157, 4294901760
    %1358 = vmatpush.msra.mxu0 %v1357
    %v1359 = vand.u32 %v1156, 4294901760
    %1360 = vmatpush.msra.mxu0 %v1359
    %v1361 = vand.u32 %v1155, 4294901760
    %1362 = vmatpush.msra.mxu0 %v1361
    %v1363 = vand.u32 %v1154, 4294901760
    %1364 = vmatpush.msra.mxu0 %v1363
    %v1365 = vand.u32 %v1153, 4294901760
    %1366 = vmatpush.msra.mxu0 %v1365
    %v1367 = vand.u32 %v1152, 4294901760
    %1368 = vmatpush.msra.mxu0 %v1367
    %v1369 = vand.u32 %v1151, 4294901760
    %1370 = vmatpush.msra.mxu0 %v1369
    %v1371 = vand.u32 %v1150, 4294901760
    %1372 = vmatpush.msra.mxu0 %v1371
    %v1373 = vand.u32 %v1149, 4294901760
    %1374 = vmatpush.msra.mxu0 %v1373
    %v1375 = vand.u32 %v1148, 4294901760
    %1376 = vmatpush.msra.mxu0 %v1375
    %v1377 = vand.u32 %v1147, 4294901760
    %1378 = vmatpush.msra.mxu0 %v1377
    %v1379 = vand.u32 %v1146, 4294901760
    %1380 = vmatpush.msra.mxu0 %v1379
    %v1381 = vand.u32 %v1145, 4294901760
    %1382 = vmatpush.msra.mxu0 %v1381
    %v1383 = vand.u32 %v1144, 4294901760
    %1384 = vmatpush.msra.mxu0 %v1383
    %v1385 = vand.u32 %v1143, 4294901760
    %1386 = vmatpush.msra.mxu0 %v1385
    %v1387 = vand.u32 %v1142, 4294901760
    %v1388 = vsub.f32 %v1142, %v1387
    %v1389 = vand.u32 %v1388, 4294901760
    %1390 = vmatmul.f32.gmra.mxu0 %v1389
    %v1391 = vpop.f32.mrf.mxu0
    %v1392 = vadd.f32 %v1353, %v1391
    %1393 = vdwg.mxu0
    %v1394 = vand.u32 %v1158, 4294901760
    %v1395 = vsub.f32 %v1158, %v1394
    %v1396 = vand.u32 %v1395, 4294901760
    %1397 = vmatpush.msra.mxu0 %v1396
    %v1398 = vand.u32 %v1157, 4294901760
    %v1399 = vsub.f32 %v1157, %v1398
    %v1400 = vand.u32 %v1399, 4294901760
    %1401 = vmatpush.msra.mxu0 %v1400
    %v1402 = vand.u32 %v1156, 4294901760
    %v1403 = vsub.f32 %v1156, %v1402
    %v1404 = vand.u32 %v1403, 4294901760
    %1405 = vmatpush.msra.mxu0 %v1404
    %v1406 = vand.u32 %v1155, 4294901760
    %v1407 = vsub.f32 %v1155, %v1406
    %v1408 = vand.u32 %v1407, 4294901760
    %1409 = vmatpush.msra.mxu0 %v1408
    %v1410 = vand.u32 %v1154, 4294901760
    %v1411 = vsub.f32 %v1154, %v1410
    %v1412 = vand.u32 %v1411, 4294901760
    %1413 = vmatpush.msra.mxu0 %v1412
    %v1414 = vand.u32 %v1153, 4294901760
    %v1415 = vsub.f32 %v1153, %v1414
    %v1416 = vand.u32 %v1415, 4294901760
    %1417 = vmatpush.msra.mxu0 %v1416
    %v1418 = vand.u32 %v1152, 4294901760
    %v1419 = vsub.f32 %v1152, %v1418
    %v1420 = vand.u32 %v1419, 4294901760
    %1421 = vmatpush.msra.mxu0 %v1420
    %v1422 = vand.u32 %v1151, 4294901760
    %v1423 = vsub.f32 %v1151, %v1422
    %v1424 = vand.u32 %v1423, 4294901760
    %1425 = vmatpush.msra.mxu0 %v1424
    %v1426 = vand.u32 %v1150, 4294901760
    %v1427 = vsub.f32 %v1150, %v1426
    %v1428 = vand.u32 %v1427, 4294901760
    %1429 = vmatpush.msra.mxu0 %v1428
    %v1430 = vand.u32 %v1149, 4294901760
    %v1431 = vsub.f32 %v1149, %v1430
    %v1432 = vand.u32 %v1431, 4294901760
    %1433 = vmatpush.msra.mxu0 %v1432
    %v1434 = vand.u32 %v1148, 4294901760
    %v1435 = vsub.f32 %v1148, %v1434
    %v1436 = vand.u32 %v1435, 4294901760
    %1437 = vmatpush.msra.mxu0 %v1436
    %v1438 = vand.u32 %v1147, 4294901760
    %v1439 = vsub.f32 %v1147, %v1438
    %v1440 = vand.u32 %v1439, 4294901760
    %1441 = vmatpush.msra.mxu0 %v1440
    %v1442 = vand.u32 %v1146, 4294901760
    %v1443 = vsub.f32 %v1146, %v1442
    %v1444 = vand.u32 %v1443, 4294901760
    %1445 = vmatpush.msra.mxu0 %v1444
    %v1446 = vand.u32 %v1145, 4294901760
    %v1447 = vsub.f32 %v1145, %v1446
    %v1448 = vand.u32 %v1447, 4294901760
    %1449 = vmatpush.msra.mxu0 %v1448
    %v1450 = vand.u32 %v1144, 4294901760
    %v1451 = vsub.f32 %v1144, %v1450
    %v1452 = vand.u32 %v1451, 4294901760
    %1453 = vmatpush.msra.mxu0 %v1452
    %v1454 = vand.u32 %v1143, 4294901760
    %v1455 = vsub.f32 %v1143, %v1454
    %v1456 = vand.u32 %v1455, 4294901760
    %1457 = vmatpush.msra.mxu0 %v1456
    %v1458 = vand.u32 %v1142, 4294901760
    %1459 = vmatmul.f32.gmra.mxu0 %v1458
    %v1460 = vpop.f32.mrf.mxu0
    %v1461 = vadd.f32 %v1392, %v1460
    %1462 = vdwg.mxu0
    %v1463 = vand.u32 %v1158, 4294901760
    %1464 = vmatpush.msra.mxu0 %v1463
    %v1465 = vand.u32 %v1157, 4294901760
    %1466 = vmatpush.msra.mxu0 %v1465
    %v1467 = vand.u32 %v1156, 4294901760
    %1468 = vmatpush.msra.mxu0 %v1467
    %v1469 = vand.u32 %v1155, 4294901760
    %1470 = vmatpush.msra.mxu0 %v1469
    %v1471 = vand.u32 %v1154, 4294901760
    %1472 = vmatpush.msra.mxu0 %v1471
    %v1473 = vand.u32 %v1153, 4294901760
    %1474 = vmatpush.msra.mxu0 %v1473
    %v1475 = vand.u32 %v1152, 4294901760
    %1476 = vmatpush.msra.mxu0 %v1475
    %v1477 = vand.u32 %v1151, 4294901760
    %1478 = vmatpush.msra.mxu0 %v1477
    %v1479 = vand.u32 %v1150, 4294901760
    %1480 = vmatpush.msra.mxu0 %v1479
    %v1481 = vand.u32 %v1149, 4294901760
    %1482 = vmatpush.msra.mxu0 %v1481
    %v1483 = vand.u32 %v1148, 4294901760
    %1484 = vmatpush.msra.mxu0 %v1483
    %v1485 = vand.u32 %v1147, 4294901760
    %1486 = vmatpush.msra.mxu0 %v1485
    %v1487 = vand.u32 %v1146, 4294901760
    %1488 = vmatpush.msra.mxu0 %v1487
    %v1489 = vand.u32 %v1145, 4294901760
    %1490 = vmatpush.msra.mxu0 %v1489
    %v1491 = vand.u32 %v1144, 4294901760
    %1492 = vmatpush.msra.mxu0 %v1491
    %v1493 = vand.u32 %v1143, 4294901760
    %1494 = vmatpush.msra.mxu0 %v1493
    %v1495 = vand.u32 %v1142, 4294901760
    %1496 = vmatmul.f32.gmra.mxu0 %v1495
    %v1497 = vpop.f32.mrf.mxu0
    %v1498 = vadd.f32 %v1461, %v1497
    %1499 = vdwg.mxu0
    %v1500 = vrcp.pop %v1498
    %v1501 = vmul.f32 %v1498, %v1500
    %v1502 = vsub.f32 1.0, %v1501
    %v1503 = vmul.f32 %v1500, %v1502
    %v1504 = vadd.f32 %v1500, %v1503
    %vm1505 = vweird.f32 %v1498
    %vm1506 = vweird.f32 %v1500
    %vm1507 = vmor %vm1505, %vm1506
    %v1508 = vsel %vm1507, %v1500, %v1504
    %v1509 = vand.u32 2147483647, %v1498
    %vm1510 = vcmp.eq.f32.partialorder %v1509, 8.507059e+37
    %v1511 = vand.u32 %v1498, 2147483648
    %v1512 = vor.u32 1.1754944e-38, %v1511
    %v1513 = vsel %vm1510, %v1512, %v1508
    %v1514 = vmul.f32 %v1142, %v1513
    %1515 = vst [vmem:[#allocation13] sm:$0xff] %v1514
    // Predicated region
    $region58: #{tpu_custom_call.1} parent=1 // pred_check
      _
    $region59: #{tpu_custom_call.1} parent=1 // pred_check_branch
      %1517 = sbr.rel (0) target = $region61
    $region60: #{tpu_custom_call.1} parent=1 // pred_region
      %1519 = vsyncadd [#allocation4], 0
      %s1521 = sshll.u32 [#allocation13], 4
      %s1522 = int_to_ptr.vmem [resolvable:$true] %s1521
      %s1523 = sshll.u32 %s8, 4
      %s1524 = int_to_ptr.hbm [resolvable:$true] %s1523
      %1526 = dma.vmem_to_hbm [thread:$0]  %s1522, 128, %s1524, [#allocation4]
    $region61: #{tpu_custom_call.1} parent=1 // pred_fallthru
      _
    // Predicated region
    $region62: #{tpu_custom_call.1} parent=1 // pred_check
      _
    $region63: #{tpu_custom_call.1} parent=1 // pred_check_branch
      %1528 = sbr.rel (0) target = $region65
    $region64: #{tpu_custom_call.1} parent=1 // pred_region
      %1530 = dma.done [#allocation4], 128
    $region65: #{tpu_custom_call.1} parent=1 // pred_fallthru
      _
    %1531 = vsyncpa [#allocation3], 1
    %1532 = vsyncpa [#allocation6], 1
    %1533 = vsyncpa [#allocation9], 1
    %1534 = vsyncpa [#allocation12], 1
    %1535 = vsyncpa [#allocation4], 1

</llo_original>
